<compile_context>
chip_gen: v7x
topology: tpu7x:2x2x1
jax: 0.10.0
libtpu: 0.0.40
codegen_flags: <defaults>
</compile_context>

<pallas_src>
import functools

import jax
import jax.numpy as jnp
from jax import lax
from jax.experimental import pallas as pl
from jax.experimental.pallas import tpu as pltpu


# ---------------------------------------------------------------------------
# Fused MHA kernel: ONE grid step for the whole batch.
#   x_ref    : (B*T, E)   f32   (flattened outside; reshape is free in XLA)
#   wqkv_ref : (E, 3E)    bf16  pre-transposed stacked [Wq*s; Wk; Wv]
#   bqkv_ref : (1, 3E)    f32   stacked [bq*s; bk; bv]
#   wo_ref   : (E, E)     bf16  pre-transposed Wo
#   bo_ref   : (1, E)     f32
#   o_ref    : (B*T, E)   f32
# ---------------------------------------------------------------------------
def _mha_fused_kernel(x_ref, wqkv_ref, bqkv_ref, wo_ref, bo_ref, o_ref,
                      *, batch, seq_len, num_heads, emb_size):
    B, T, E, H = batch, seq_len, emb_size, num_heads
    D = E // H

    # Single fat QKV projection: (B*T, E) @ (E, 3E), bf16 operands, f32 acc.
    x = x_ref[...].astype(jnp.bfloat16)                                # (B*T, E)
    qkv = jnp.dot(x, wqkv_ref[...],
                  preferred_element_type=jnp.float32) + bqkv_ref[...]  # (B*T,3E)
    qkv = qkv.astype(jnp.bfloat16)

    wo = wo_ref[...]                                                   # (E,E) bf16
    bo = bo_ref[...]                                                   # (1,E) f32

    # Static Python loops: B and H are tiny compile-time constants, so the
    # whole attention stays in vregs with one f32 accumulator per batch row
    # block (no head-output concat, no per-head grid / transposes).
    for b in range(B):
        r0 = b * T
        acc = jnp.zeros((T, E), jnp.float32)
        for h in range(H):
            q_h = qkv[r0:r0 + T, h * D:(h + 1) * D]                    # (T, D)
            k_h = qkv[r0:r0 + T, E + h * D:E + (h + 1) * D]            # (T, D)
            v_h = qkv[r0:r0 + T, 2 * E + h * D:2 * E + (h + 1) * D]    # (T, D)

            # q . k^T ; the 1/sqrt(E) scale is already folded into Wq/bq.
            # NOTE(perf review): at production shapes, verify via
            # pl.lower_as_mlir that this RHS last-dim contraction does not
            # insert a vxpose of k_h on the MXU feed path.
            s = lax.dot_general(q_h, k_h, (((1,), (1,)), ((), ())),
                                preferred_element_type=jnp.float32)    # (T, T)
            s = s - jnp.max(s, axis=-1, keepdims=True)                 # stable
            p = jnp.exp(s)
            # EUP approximate reciprocal -> divide leaves the VALU slot.
            p = p * pl.reciprocal(jnp.sum(p, axis=-1, keepdims=True),
                                  approx=True)

            ctx = jnp.dot(p.astype(jnp.bfloat16), v_h,
                          preferred_element_type=jnp.float32)          # (T, D)
            # Per-head output projection through the sublane-aligned rows of
            # Wo^T, accumulated in f32 — replaces jnp.concatenate(head_outs).
            acc = acc + jnp.dot(ctx.astype(jnp.bfloat16),
                                wo[h * D:(h + 1) * D, :],
                                preferred_element_type=jnp.float32)    # (T, E)

        o_ref[r0:r0 + T, :] = acc + bo


# ---------------------------------------------------------------------------
# One-time parameter fusion (hoisted out of the per-call wrapper):
#   * stack Q/K/V weights (PyTorch (out,in) layout) and pre-transpose to
#     (E, 3E) so the kernel computes x @ W directly,
#   * fold the 1/sqrt(E) attention scale into Wq / bq,
#   * store matmul weights in bf16 (MXU-native), biases in f32.
# ---------------------------------------------------------------------------
def fuse_mha_params(params, emb_size):
    E = emb_size
    scale = 1.0 / (E ** 0.5)   # reference scales the energy by 1/sqrt(emb_size)
    wq = params["wq"] * scale
    bq = params["bq"] * scale
    wqkv = jnp.concatenate([wq, params["wk"], params["wv"]], axis=0).T  # (E,3E)
    bqkv = jnp.concatenate([bq, params["bk"], params["bv"]]).reshape(1, 3 * E)
    return {
        "wqkv": wqkv.astype(jnp.bfloat16),
        "bqkv": bqkv.astype(jnp.float32),
        "wo_t": params["wo"].T.astype(jnp.bfloat16),                    # (E, E)
        "bo": params["bo"].reshape(1, E).astype(jnp.float32),
    }


# ---------------------------------------------------------------------------
# Wrapper: single pallas_call, single grid step.
# ---------------------------------------------------------------------------
def multi_head_attention(x, fused, num_heads):
    """Forward pass of the MHA block. x: (B, T, E) float32."""
    B, T, E = x.shape
    H = num_heads
    D = E // H
    x2 = x.reshape(B * T, E)   # free metadata reshape outside the kernel

    kern = functools.partial(_mha_fused_kernel, batch=B, seq_len=T,
                             num_heads=H, emb_size=E)

    flops = (2 * B * T * E * 3 * E          # QKV projection
             + 4 * B * H * T * T * D        # q.k^T + p.v
             + 2 * B * T * E * E)           # output projection
    bytes_accessed = (x2.size * 4 + B * T * E * 4
                      + fused["wqkv"].size * 2 + fused["wo_t"].size * 2
                      + fused["bqkv"].size * 4 + fused["bo"].size * 4)
    cost = pl.CostEstimate(flops=flops,
                           transcendentals=B * H * T * T,
                           bytes_accessed=bytes_accessed)

    out = pl.pallas_call(
        kern,
        out_shape=jax.ShapeDtypeStruct((B * T, E), jnp.float32),
        grid_spec=pltpu.PrefetchScalarGridSpec(
            num_scalar_prefetch=0,
            grid=(1,),   # one fat step: whole working set VMEM-resident
            in_specs=[
                pl.BlockSpec((B * T, E), lambda i: (0, 0)),     # x (flat)
                pl.BlockSpec((E, 3 * E), lambda i: (0, 0)),     # Wqkv (bf16)
                pl.BlockSpec((1, 3 * E), lambda i: (0, 0)),     # bqkv
                pl.BlockSpec((E, E), lambda i: (0, 0)),         # Wo^T (bf16)
                pl.BlockSpec((1, E), lambda i: (0, 0)),         # bo
            ],
            out_specs=pl.BlockSpec((B * T, E), lambda i: (0, 0)),
        ),
        compiler_params=pltpu.CompilerParams(
            dimension_semantics=("arbitrary",)),
        cost_estimate=cost,
    )(x2, fused["wqkv"], fused["bqkv"], fused["wo_t"], fused["bo"])

    return out.reshape(B, T, E)


# ---------------------------------------------------------------------------
# Parameter init (PyTorch nn.Linear weight layout: (out_features, in_features))
# ---------------------------------------------------------------------------
def init_mha_params(key, emb_size):
    ks = jax.random.split(key, 8)

    def w(k):
        return (0.02 * jax.random.normal(k, (emb_size, emb_size))
                ).astype(jnp.float32)

    def b(k):
        return (0.02 * jax.random.normal(k, (emb_size,))).astype(jnp.float32)

    return {
        "wq": w(ks[0]), "bq": b(ks[1]),
        "wk": w(ks[2]), "bk": b(ks[3]),
        "wv": w(ks[4]), "bv": b(ks[5]),
        "wo": w(ks[6]), "bo": b(ks[7]),
    }


# ---------------------------------------------------------------------------
# Pure-JAX reference (matches the PyTorch module's forward, full f32)
# ---------------------------------------------------------------------------
def _reference(x, params, num_heads):
    B, T, E = x.shape
    H, D = num_heads, E // num_heads
    q = x @ params["wq"].T + params["bq"]
    k = x @ params["wk"].T + params["bk"]
    v = x @ params["wv"].T + params["bv"]
    q = q.reshape(B, T, H, D).transpose(0, 2, 1, 3)
    k = k.reshape(B, T, H, D).transpose(0, 2, 1, 3)
    v = v.reshape(B, T, H, D).transpose(0, 2, 1, 3)
    energy = jnp.einsum("bhtd,bhsd->bhts", q, k)
    att = jax.nn.softmax(energy / (E ** 0.5), axis=-1)
    out = jnp.einsum("bhts,bhsd->bhtd", att, v)
    out = out.transpose(0, 2, 1, 3).reshape(B, T, E)
    return out @ params["wo"].T + params["bo"]


if __name__ == "__main__":
    B, T, E, H = 2, 8, 32, 4   # batch, seq, emb_size, num_heads (head_dim = 8)

    key = jax.random.PRNGKey(0)
    kx, kp = jax.random.split(key)
    x = jax.random.normal(kx, (B, T, E), dtype=jnp.float32)
    params = init_mha_params(kp, E)
    fused = fuse_mha_params(params, E)   # one-time weight fusion (init-time)

    out = multi_head_attention(x, fused, num_heads=H)
    out = jax.block_until_ready(out)

    ref = _reference(x, params, num_heads=H)
    assert out.shape == (B, T, E)
    # bf16 MXU operands + approx EUP reciprocal -> allow a few e-3 slack
    # against the exact-f32 reference.
    assert jnp.allclose(out, ref, atol=1e-2, rtol=5e-2), "mismatch vs reference"

    print("KERNEL_OK")
</pallas_src>

<mosaic_0001>
module attributes {stable_mosaic.version = 11 : i64} {
  func.func @_mha_fused_kernel(%arg0: i32, %arg1: memref<16x32xf32, #tpu.memory_space<vmem>>, %arg2: memref<32x96xbf16, #tpu.memory_space<vmem>>, %arg3: memref<1x96xf32, #tpu.memory_space<vmem>>, %arg4: memref<32x32xbf16, #tpu.memory_space<vmem>>, %arg5: memref<1x32xf32, #tpu.memory_space<vmem>>, %arg6: memref<16x32xf32, #tpu.memory_space<vmem>>) attributes {dimension_semantics = [#tpu.dimension_semantics<arbitrary>], iteration_bounds = array<i64: 1>, scalar_prefetch = 0 : i64, scratch_operands = 0 : i64, tpu.core_type = #tpu.core_type<tc>, window_params = [{pipeline_mode = #tpu.pipeline_mode<synchronous>, transform_indices = @transform_0, window_bounds = array<i64: 16, 32>}, {pipeline_mode = #tpu.pipeline_mode<synchronous>, transform_indices = @transform_1, window_bounds = array<i64: 32, 96>}, {pipeline_mode = #tpu.pipeline_mode<synchronous>, transform_indices = @transform_2, window_bounds = array<i64: 1, 96>}, {pipeline_mode = #tpu.pipeline_mode<synchronous>, transform_indices = @transform_3, window_bounds = array<i64: 32, 32>}, {pipeline_mode = #tpu.pipeline_mode<synchronous>, transform_indices = @transform_4, window_bounds = array<i64: 1, 32>}, {pipeline_mode = #tpu.pipeline_mode<synchronous>, transform_indices = @transform_5, window_bounds = array<i64: 16, 32>}]} {
    %c0 = arith.constant 0 : index
    %c0_0 = arith.constant 0 : index
    %0 = vector.load %arg1[%c0, %c0_0] : memref<16x32xf32, #tpu.memory_space<vmem>>, vector<16x32xf32>
    %1 = arith.truncf %0 : vector<16x32xf32> to vector<16x32xbf16>
    %c0_1 = arith.constant 0 : index
    %c0_2 = arith.constant 0 : index
    %2 = vector.load %arg2[%c0_1, %c0_2] : memref<32x96xbf16, #tpu.memory_space<vmem>>, vector<32x96xbf16>
    %cst = arith.constant dense<0.000000e+00> : vector<16x96xf32>
    %3 = tpu.matmul %1, %2, %cst {dimension_numbers = #tpu.dot_dimension_numbers<[1], [0], [0], [1], [0, 0, 1, 1], [], []>} : vector<16x32xbf16>, vector<32x96xbf16>, vector<16x96xf32> -> vector<16x96xf32>
    %c0_3 = arith.constant 0 : index
    %c0_4 = arith.constant 0 : index
    %4 = vector.load %arg3[%c0_3, %c0_4] : memref<1x96xf32, #tpu.memory_space<vmem>>, vector<1x96xf32>
    %5 = vector.broadcast %4 : vector<1x96xf32> to vector<16x96xf32>
    %6 = arith.addf %3, %5 : vector<16x96xf32>
    %7 = arith.truncf %6 : vector<16x96xf32> to vector<16x96xbf16>
    %c0_5 = arith.constant 0 : index
    %c0_6 = arith.constant 0 : index
    %8 = vector.load %arg4[%c0_5, %c0_6] : memref<32x32xbf16, #tpu.memory_space<vmem>>, vector<32x32xbf16>
    %c0_7 = arith.constant 0 : index
    %c0_8 = arith.constant 0 : index
    %9 = vector.load %arg5[%c0_7, %c0_8] : memref<1x32xf32, #tpu.memory_space<vmem>>, vector<1x32xf32>
    %cst_9 = arith.constant 0.000000e+00 : f32
    %10 = vector.broadcast %cst_9 : f32 to vector<8x32xf32>
    %11 = vector.extract_strided_slice %7 {offsets = [0, 0], sizes = [8, 8], strides = [1, 1]} : vector<16x96xbf16> to vector<8x8xbf16>
    %12 = vector.extract_strided_slice %7 {offsets = [0, 32], sizes = [8, 8], strides = [1, 1]} : vector<16x96xbf16> to vector<8x8xbf16>
    %13 = vector.extract_strided_slice %7 {offsets = [0, 64], sizes = [8, 8], strides = [1, 1]} : vector<16x96xbf16> to vector<8x8xbf16>
    %cst_10 = arith.constant dense<0.000000e+00> : vector<8x8xf32>
    %14 = tpu.matmul %11, %12, %cst_10 {dimension_numbers = #tpu.dot_dimension_numbers<[1], [1], [0], [0], [0, 0, 1, 0], [], []>} : vector<8x8xbf16>, vector<8x8xbf16>, vector<8x8xf32> -> vector<8x8xf32>
    %cst_11 = arith.constant dense<0xFF800000> : vector<8xf32>
    %15 = vector.multi_reduction <maximumf>, %14, %cst_11 [1] : vector<8x8xf32> to vector<8xf32>
    %16 = vector.shape_cast %15 : vector<8xf32> to vector<8x1xf32>
    %17 = vector.broadcast %16 : vector<8x1xf32> to vector<8x8xf32>
    %18 = arith.subf %14, %17 : vector<8x8xf32>
    %19 = math.exp %18 : vector<8x8xf32>
    %cst_12 = arith.constant dense<0.000000e+00> : vector<8xf32>
    %20 = vector.multi_reduction <add>, %19, %cst_12 [1] : vector<8x8xf32> to vector<8xf32>
    %21 = vector.shape_cast %20 : vector<8xf32> to vector<8x1xf32>
    %22 = tpu.reciprocal %21 {approx = true} : vector<8x1xf32> -> vector<8x1xf32>
    %23 = vector.broadcast %22 : vector<8x1xf32> to vector<8x8xf32>
    %24 = arith.mulf %19, %23 : vector<8x8xf32>
    %25 = arith.truncf %24 : vector<8x8xf32> to vector<8x8xbf16>
    %cst_13 = arith.constant dense<0.000000e+00> : vector<8x8xf32>
    %26 = tpu.matmul %25, %13, %cst_13 {dimension_numbers = #tpu.dot_dimension_numbers<[1], [0], [0], [1], [0, 0, 1, 1], [], []>} : vector<8x8xbf16>, vector<8x8xbf16>, vector<8x8xf32> -> vector<8x8xf32>
    %27 = arith.truncf %26 : vector<8x8xf32> to vector<8x8xbf16>
    %28 = vector.extract_strided_slice %8 {offsets = [0, 0], sizes = [8, 32], strides = [1, 1]} : vector<32x32xbf16> to vector<8x32xbf16>
    %cst_14 = arith.constant dense<0.000000e+00> : vector<8x32xf32>
    %29 = tpu.matmul %27, %28, %cst_14 {dimension_numbers = #tpu.dot_dimension_numbers<[1], [0], [0], [1], [0, 0, 1, 1], [], []>} : vector<8x8xbf16>, vector<8x32xbf16>, vector<8x32xf32> -> vector<8x32xf32>
    %30 = arith.addf %10, %29 : vector<8x32xf32>
    %31 = vector.extract_strided_slice %7 {offsets = [0, 8], sizes = [8, 8], strides = [1, 1]} : vector<16x96xbf16> to vector<8x8xbf16>
    %32 = vector.extract_strided_slice %7 {offsets = [0, 40], sizes = [8, 8], strides = [1, 1]} : vector<16x96xbf16> to vector<8x8xbf16>
    %33 = vector.extract_strided_slice %7 {offsets = [0, 72], sizes = [8, 8], strides = [1, 1]} : vector<16x96xbf16> to vector<8x8xbf16>
    %cst_15 = arith.constant dense<0.000000e+00> : vector<8x8xf32>
    %34 = tpu.matmul %31, %32, %cst_15 {dimension_numbers = #tpu.dot_dimension_numbers<[1], [1], [0], [0], [0, 0, 1, 0], [], []>} : vector<8x8xbf16>, vector<8x8xbf16>, vector<8x8xf32> -> vector<8x8xf32>
    %cst_16 = arith.constant dense<0xFF800000> : vector<8xf32>
    %35 = vector.multi_reduction <maximumf>, %34, %cst_16 [1] : vector<8x8xf32> to vector<8xf32>
    %36 = vector.shape_cast %35 : vector<8xf32> to vector<8x1xf32>
    %37 = vector.broadcast %36 : vector<8x1xf32> to vector<8x8xf32>
    %38 = arith.subf %34, %37 : vector<8x8xf32>
    %39 = math.exp %38 : vector<8x8xf32>
    %cst_17 = arith.constant dense<0.000000e+00> : vector<8xf32>
    %40 = vector.multi_reduction <add>, %39, %cst_17 [1] : vector<8x8xf32> to vector<8xf32>
    %41 = vector.shape_cast %40 : vector<8xf32> to vector<8x1xf32>
    %42 = tpu.reciprocal %41 {approx = true} : vector<8x1xf32> -> vector<8x1xf32>
    %43 = vector.broadcast %42 : vector<8x1xf32> to vector<8x8xf32>
    %44 = arith.mulf %39, %43 : vector<8x8xf32>
    %45 = arith.truncf %44 : vector<8x8xf32> to vector<8x8xbf16>
    %cst_18 = arith.constant dense<0.000000e+00> : vector<8x8xf32>
    %46 = tpu.matmul %45, %33, %cst_18 {dimension_numbers = #tpu.dot_dimension_numbers<[1], [0], [0], [1], [0, 0, 1, 1], [], []>} : vector<8x8xbf16>, vector<8x8xbf16>, vector<8x8xf32> -> vector<8x8xf32>
    %47 = arith.truncf %46 : vector<8x8xf32> to vector<8x8xbf16>
    %48 = vector.extract_strided_slice %8 {offsets = [8, 0], sizes = [8, 32], strides = [1, 1]} : vector<32x32xbf16> to vector<8x32xbf16>
    %cst_19 = arith.constant dense<0.000000e+00> : vector<8x32xf32>
    %49 = tpu.matmul %47, %48, %cst_19 {dimension_numbers = #tpu.dot_dimension_numbers<[1], [0], [0], [1], [0, 0, 1, 1], [], []>} : vector<8x8xbf16>, vector<8x32xbf16>, vector<8x32xf32> -> vector<8x32xf32>
    %50 = arith.addf %30, %49 : vector<8x32xf32>
    %51 = vector.extract_strided_slice %7 {offsets = [0, 16], sizes = [8, 8], strides = [1, 1]} : vector<16x96xbf16> to vector<8x8xbf16>
    %52 = vector.extract_strided_slice %7 {offsets = [0, 48], sizes = [8, 8], strides = [1, 1]} : vector<16x96xbf16> to vector<8x8xbf16>
    %53 = vector.extract_strided_slice %7 {offsets = [0, 80], sizes = [8, 8], strides = [1, 1]} : vector<16x96xbf16> to vector<8x8xbf16>
    %cst_20 = arith.constant dense<0.000000e+00> : vector<8x8xf32>
    %54 = tpu.matmul %51, %52, %cst_20 {dimension_numbers = #tpu.dot_dimension_numbers<[1], [1], [0], [0], [0, 0, 1, 0], [], []>} : vector<8x8xbf16>, vector<8x8xbf16>, vector<8x8xf32> -> vector<8x8xf32>
    %cst_21 = arith.constant dense<0xFF800000> : vector<8xf32>
    %55 = vector.multi_reduction <maximumf>, %54, %cst_21 [1] : vector<8x8xf32> to vector<8xf32>
    %56 = vector.shape_cast %55 : vector<8xf32> to vector<8x1xf32>
    %57 = vector.broadcast %56 : vector<8x1xf32> to vector<8x8xf32>
    %58 = arith.subf %54, %57 : vector<8x8xf32>
    %59 = math.exp %58 : vector<8x8xf32>
    %cst_22 = arith.constant dense<0.000000e+00> : vector<8xf32>
    %60 = vector.multi_reduction <add>, %59, %cst_22 [1] : vector<8x8xf32> to vector<8xf32>
    %61 = vector.shape_cast %60 : vector<8xf32> to vector<8x1xf32>
    %62 = tpu.reciprocal %61 {approx = true} : vector<8x1xf32> -> vector<8x1xf32>
    %63 = vector.broadcast %62 : vector<8x1xf32> to vector<8x8xf32>
    %64 = arith.mulf %59, %63 : vector<8x8xf32>
    %65 = arith.truncf %64 : vector<8x8xf32> to vector<8x8xbf16>
    %cst_23 = arith.constant dense<0.000000e+00> : vector<8x8xf32>
    %66 = tpu.matmul %65, %53, %cst_23 {dimension_numbers = #tpu.dot_dimension_numbers<[1], [0], [0], [1], [0, 0, 1, 1], [], []>} : vector<8x8xbf16>, vector<8x8xbf16>, vector<8x8xf32> -> vector<8x8xf32>
    %67 = arith.truncf %66 : vector<8x8xf32> to vector<8x8xbf16>
    %68 = vector.extract_strided_slice %8 {offsets = [16, 0], sizes = [8, 32], strides = [1, 1]} : vector<32x32xbf16> to vector<8x32xbf16>
    %cst_24 = arith.constant dense<0.000000e+00> : vector<8x32xf32>
    %69 = tpu.matmul %67, %68, %cst_24 {dimension_numbers = #tpu.dot_dimension_numbers<[1], [0], [0], [1], [0, 0, 1, 1], [], []>} : vector<8x8xbf16>, vector<8x32xbf16>, vector<8x32xf32> -> vector<8x32xf32>
    %70 = arith.addf %50, %69 : vector<8x32xf32>
    %71 = vector.extract_strided_slice %7 {offsets = [0, 24], sizes = [8, 8], strides = [1, 1]} : vector<16x96xbf16> to vector<8x8xbf16>
    %72 = vector.extract_strided_slice %7 {offsets = [0, 56], sizes = [8, 8], strides = [1, 1]} : vector<16x96xbf16> to vector<8x8xbf16>
    %73 = vector.extract_strided_slice %7 {offsets = [0, 88], sizes = [8, 8], strides = [1, 1]} : vector<16x96xbf16> to vector<8x8xbf16>
    %cst_25 = arith.constant dense<0.000000e+00> : vector<8x8xf32>
    %74 = tpu.matmul %71, %72, %cst_25 {dimension_numbers = #tpu.dot_dimension_numbers<[1], [1], [0], [0], [0, 0, 1, 0], [], []>} : vector<8x8xbf16>, vector<8x8xbf16>, vector<8x8xf32> -> vector<8x8xf32>
    %cst_26 = arith.constant dense<0xFF800000> : vector<8xf32>
    %75 = vector.multi_reduction <maximumf>, %74, %cst_26 [1] : vector<8x8xf32> to vector<8xf32>
    %76 = vector.shape_cast %75 : vector<8xf32> to vector<8x1xf32>
    %77 = vector.broadcast %76 : vector<8x1xf32> to vector<8x8xf32>
    %78 = arith.subf %74, %77 : vector<8x8xf32>
    %79 = math.exp %78 : vector<8x8xf32>
    %cst_27 = arith.constant dense<0.000000e+00> : vector<8xf32>
    %80 = vector.multi_reduction <add>, %79, %cst_27 [1] : vector<8x8xf32> to vector<8xf32>
    %81 = vector.shape_cast %80 : vector<8xf32> to vector<8x1xf32>
    %82 = tpu.reciprocal %81 {approx = true} : vector<8x1xf32> -> vector<8x1xf32>
    %83 = vector.broadcast %82 : vector<8x1xf32> to vector<8x8xf32>
    %84 = arith.mulf %79, %83 : vector<8x8xf32>
    %85 = arith.truncf %84 : vector<8x8xf32> to vector<8x8xbf16>
    %cst_28 = arith.constant dense<0.000000e+00> : vector<8x8xf32>
    %86 = tpu.matmul %85, %73, %cst_28 {dimension_numbers = #tpu.dot_dimension_numbers<[1], [0], [0], [1], [0, 0, 1, 1], [], []>} : vector<8x8xbf16>, vector<8x8xbf16>, vector<8x8xf32> -> vector<8x8xf32>
    %87 = arith.truncf %86 : vector<8x8xf32> to vector<8x8xbf16>
    %88 = vector.extract_strided_slice %8 {offsets = [24, 0], sizes = [8, 32], strides = [1, 1]} : vector<32x32xbf16> to vector<8x32xbf16>
    %cst_29 = arith.constant dense<0.000000e+00> : vector<8x32xf32>
    %89 = tpu.matmul %87, %88, %cst_29 {dimension_numbers = #tpu.dot_dimension_numbers<[1], [0], [0], [1], [0, 0, 1, 1], [], []>} : vector<8x8xbf16>, vector<8x32xbf16>, vector<8x32xf32> -> vector<8x32xf32>
    %90 = arith.addf %70, %89 : vector<8x32xf32>
    %91 = vector.broadcast %9 : vector<1x32xf32> to vector<8x32xf32>
    %92 = arith.addf %90, %91 : vector<8x32xf32>
    %c0_30 = arith.constant 0 : index
    %c0_31 = arith.constant 0 : index
    %93 = vector.load %arg6[%c0_30, %c0_31] : memref<16x32xf32, #tpu.memory_space<vmem>>, vector<8x32xf32>
    tpu.vector_store %arg6[%c0_30, %c0_31], %92 {strides = array<i32>} : memref<16x32xf32, #tpu.memory_space<vmem>>, vector<8x32xf32>,
    %cst_32 = arith.constant 0.000000e+00 : f32
    %94 = vector.broadcast %cst_32 : f32 to vector<8x32xf32>
    %95 = vector.extract_strided_slice %7 {offsets = [8, 0], sizes = [8, 8], strides = [1, 1]} : vector<16x96xbf16> to vector<8x8xbf16>
    %96 = vector.extract_strided_slice %7 {offsets = [8, 32], sizes = [8, 8], strides = [1, 1]} : vector<16x96xbf16> to vector<8x8xbf16>
    %97 = vector.extract_strided_slice %7 {offsets = [8, 64], sizes = [8, 8], strides = [1, 1]} : vector<16x96xbf16> to vector<8x8xbf16>
    %cst_33 = arith.constant dense<0.000000e+00> : vector<8x8xf32>
    %98 = tpu.matmul %95, %96, %cst_33 {dimension_numbers = #tpu.dot_dimension_numbers<[1], [1], [0], [0], [0, 0, 1, 0], [], []>} : vector<8x8xbf16>, vector<8x8xbf16>, vector<8x8xf32> -> vector<8x8xf32>
    %cst_34 = arith.constant dense<0xFF800000> : vector<8xf32>
    %99 = vector.multi_reduction <maximumf>, %98, %cst_34 [1] : vector<8x8xf32> to vector<8xf32>
    %100 = vector.shape_cast %99 : vector<8xf32> to vector<8x1xf32>
    %101 = vector.broadcast %100 : vector<8x1xf32> to vector<8x8xf32>
    %102 = arith.subf %98, %101 : vector<8x8xf32>
    %103 = math.exp %102 : vector<8x8xf32>
    %cst_35 = arith.constant dense<0.000000e+00> : vector<8xf32>
    %104 = vector.multi_reduction <add>, %103, %cst_35 [1] : vector<8x8xf32> to vector<8xf32>
    %105 = vector.shape_cast %104 : vector<8xf32> to vector<8x1xf32>
    %106 = tpu.reciprocal %105 {approx = true} : vector<8x1xf32> -> vector<8x1xf32>
    %107 = vector.broadcast %106 : vector<8x1xf32> to vector<8x8xf32>
    %108 = arith.mulf %103, %107 : vector<8x8xf32>
    %109 = arith.truncf %108 : vector<8x8xf32> to vector<8x8xbf16>
    %cst_36 = arith.constant dense<0.000000e+00> : vector<8x8xf32>
    %110 = tpu.matmul %109, %97, %cst_36 {dimension_numbers = #tpu.dot_dimension_numbers<[1], [0], [0], [1], [0, 0, 1, 1], [], []>} : vector<8x8xbf16>, vector<8x8xbf16>, vector<8x8xf32> -> vector<8x8xf32>
    %111 = arith.truncf %110 : vector<8x8xf32> to vector<8x8xbf16>
    %112 = vector.extract_strided_slice %8 {offsets = [0, 0], sizes = [8, 32], strides = [1, 1]} : vector<32x32xbf16> to vector<8x32xbf16>
    %cst_37 = arith.constant dense<0.000000e+00> : vector<8x32xf32>
    %113 = tpu.matmul %111, %112, %cst_37 {dimension_numbers = #tpu.dot_dimension_numbers<[1], [0], [0], [1], [0, 0, 1, 1], [], []>} : vector<8x8xbf16>, vector<8x32xbf16>, vector<8x32xf32> -> vector<8x32xf32>
    %114 = arith.addf %94, %113 : vector<8x32xf32>
    %115 = vector.extract_strided_slice %7 {offsets = [8, 8], sizes = [8, 8], strides = [1, 1]} : vector<16x96xbf16> to vector<8x8xbf16>
    %116 = vector.extract_strided_slice %7 {offsets = [8, 40], sizes = [8, 8], strides = [1, 1]} : vector<16x96xbf16> to vector<8x8xbf16>
    %117 = vector.extract_strided_slice %7 {offsets = [8, 72], sizes = [8, 8], strides = [1, 1]} : vector<16x96xbf16> to vector<8x8xbf16>
    %cst_38 = arith.constant dense<0.000000e+00> : vector<8x8xf32>
    %118 = tpu.matmul %115, %116, %cst_38 {dimension_numbers = #tpu.dot_dimension_numbers<[1], [1], [0], [0], [0, 0, 1, 0], [], []>} : vector<8x8xbf16>, vector<8x8xbf16>, vector<8x8xf32> -> vector<8x8xf32>
    %cst_39 = arith.constant dense<0xFF800000> : vector<8xf32>
    %119 = vector.multi_reduction <maximumf>, %118, %cst_39 [1] : vector<8x8xf32> to vector<8xf32>
    %120 = vector.shape_cast %119 : vector<8xf32> to vector<8x1xf32>
    %121 = vector.broadcast %120 : vector<8x1xf32> to vector<8x8xf32>
    %122 = arith.subf %118, %121 : vector<8x8xf32>
    %123 = math.exp %122 : vector<8x8xf32>
    %cst_40 = arith.constant dense<0.000000e+00> : vector<8xf32>
    %124 = vector.multi_reduction <add>, %123, %cst_40 [1] : vector<8x8xf32> to vector<8xf32>
    %125 = vector.shape_cast %124 : vector<8xf32> to vector<8x1xf32>
    %126 = tpu.reciprocal %125 {approx = true} : vector<8x1xf32> -> vector<8x1xf32>
    %127 = vector.broadcast %126 : vector<8x1xf32> to vector<8x8xf32>
    %128 = arith.mulf %123, %127 : vector<8x8xf32>
    %129 = arith.truncf %128 : vector<8x8xf32> to vector<8x8xbf16>
    %cst_41 = arith.constant dense<0.000000e+00> : vector<8x8xf32>
    %130 = tpu.matmul %129, %117, %cst_41 {dimension_numbers = #tpu.dot_dimension_numbers<[1], [0], [0], [1], [0, 0, 1, 1], [], []>} : vector<8x8xbf16>, vector<8x8xbf16>, vector<8x8xf32> -> vector<8x8xf32>
    %131 = arith.truncf %130 : vector<8x8xf32> to vector<8x8xbf16>
    %132 = vector.extract_strided_slice %8 {offsets = [8, 0], sizes = [8, 32], strides = [1, 1]} : vector<32x32xbf16> to vector<8x32xbf16>
    %cst_42 = arith.constant dense<0.000000e+00> : vector<8x32xf32>
    %133 = tpu.matmul %131, %132, %cst_42 {dimension_numbers = #tpu.dot_dimension_numbers<[1], [0], [0], [1], [0, 0, 1, 1], [], []>} : vector<8x8xbf16>, vector<8x32xbf16>, vector<8x32xf32> -> vector<8x32xf32>
    %134 = arith.addf %114, %133 : vector<8x32xf32>
    %135 = vector.extract_strided_slice %7 {offsets = [8, 16], sizes = [8, 8], strides = [1, 1]} : vector<16x96xbf16> to vector<8x8xbf16>
    %136 = vector.extract_strided_slice %7 {offsets = [8, 48], sizes = [8, 8], strides = [1, 1]} : vector<16x96xbf16> to vector<8x8xbf16>
    %137 = vector.extract_strided_slice %7 {offsets = [8, 80], sizes = [8, 8], strides = [1, 1]} : vector<16x96xbf16> to vector<8x8xbf16>
    %cst_43 = arith.constant dense<0.000000e+00> : vector<8x8xf32>
    %138 = tpu.matmul %135, %136, %cst_43 {dimension_numbers = #tpu.dot_dimension_numbers<[1], [1], [0], [0], [0, 0, 1, 0], [], []>} : vector<8x8xbf16>, vector<8x8xbf16>, vector<8x8xf32> -> vector<8x8xf32>
    %cst_44 = arith.constant dense<0xFF800000> : vector<8xf32>
    %139 = vector.multi_reduction <maximumf>, %138, %cst_44 [1] : vector<8x8xf32> to vector<8xf32>
    %140 = vector.shape_cast %139 : vector<8xf32> to vector<8x1xf32>
    %141 = vector.broadcast %140 : vector<8x1xf32> to vector<8x8xf32>
    %142 = arith.subf %138, %141 : vector<8x8xf32>
    %143 = math.exp %142 : vector<8x8xf32>
    %cst_45 = arith.constant dense<0.000000e+00> : vector<8xf32>
    %144 = vector.multi_reduction <add>, %143, %cst_45 [1] : vector<8x8xf32> to vector<8xf32>
    %145 = vector.shape_cast %144 : vector<8xf32> to vector<8x1xf32>
    %146 = tpu.reciprocal %145 {approx = true} : vector<8x1xf32> -> vector<8x1xf32>
    %147 = vector.broadcast %146 : vector<8x1xf32> to vector<8x8xf32>
    %148 = arith.mulf %143, %147 : vector<8x8xf32>
    %149 = arith.truncf %148 : vector<8x8xf32> to vector<8x8xbf16>
    %cst_46 = arith.constant dense<0.000000e+00> : vector<8x8xf32>
    %150 = tpu.matmul %149, %137, %cst_46 {dimension_numbers = #tpu.dot_dimension_numbers<[1], [0], [0], [1], [0, 0, 1, 1], [], []>} : vector<8x8xbf16>, vector<8x8xbf16>, vector<8x8xf32> -> vector<8x8xf32>
    %151 = arith.truncf %150 : vector<8x8xf32> to vector<8x8xbf16>
    %152 = vector.extract_strided_slice %8 {offsets = [16, 0], sizes = [8, 32], strides = [1, 1]} : vector<32x32xbf16> to vector<8x32xbf16>
    %cst_47 = arith.constant dense<0.000000e+00> : vector<8x32xf32>
    %153 = tpu.matmul %151, %152, %cst_47 {dimension_numbers = #tpu.dot_dimension_numbers<[1], [0], [0], [1], [0, 0, 1, 1], [], []>} : vector<8x8xbf16>, vector<8x32xbf16>, vector<8x32xf32> -> vector<8x32xf32>
    %154 = arith.addf %134, %153 : vector<8x32xf32>
    %155 = vector.extract_strided_slice %7 {offsets = [8, 24], sizes = [8, 8], strides = [1, 1]} : vector<16x96xbf16> to vector<8x8xbf16>
    %156 = vector.extract_strided_slice %7 {offsets = [8, 56], sizes = [8, 8], strides = [1, 1]} : vector<16x96xbf16> to vector<8x8xbf16>
    %157 = vector.extract_strided_slice %7 {offsets = [8, 88], sizes = [8, 8], strides = [1, 1]} : vector<16x96xbf16> to vector<8x8xbf16>
    %cst_48 = arith.constant dense<0.000000e+00> : vector<8x8xf32>
    %158 = tpu.matmul %155, %156, %cst_48 {dimension_numbers = #tpu.dot_dimension_numbers<[1], [1], [0], [0], [0, 0, 1, 0], [], []>} : vector<8x8xbf16>, vector<8x8xbf16>, vector<8x8xf32> -> vector<8x8xf32>
    %cst_49 = arith.constant dense<0xFF800000> : vector<8xf32>
    %159 = vector.multi_reduction <maximumf>, %158, %cst_49 [1] : vector<8x8xf32> to vector<8xf32>
    %160 = vector.shape_cast %159 : vector<8xf32> to vector<8x1xf32>
    %161 = vector.broadcast %160 : vector<8x1xf32> to vector<8x8xf32>
    %162 = arith.subf %158, %161 : vector<8x8xf32>
    %163 = math.exp %162 : vector<8x8xf32>
    %cst_50 = arith.constant dense<0.000000e+00> : vector<8xf32>
    %164 = vector.multi_reduction <add>, %163, %cst_50 [1] : vector<8x8xf32> to vector<8xf32>
    %165 = vector.shape_cast %164 : vector<8xf32> to vector<8x1xf32>
    %166 = tpu.reciprocal %165 {approx = true} : vector<8x1xf32> -> vector<8x1xf32>
    %167 = vector.broadcast %166 : vector<8x1xf32> to vector<8x8xf32>
    %168 = arith.mulf %163, %167 : vector<8x8xf32>
    %169 = arith.truncf %168 : vector<8x8xf32> to vector<8x8xbf16>
    %cst_51 = arith.constant dense<0.000000e+00> : vector<8x8xf32>
    %170 = tpu.matmul %169, %157, %cst_51 {dimension_numbers = #tpu.dot_dimension_numbers<[1], [0], [0], [1], [0, 0, 1, 1], [], []>} : vector<8x8xbf16>, vector<8x8xbf16>, vector<8x8xf32> -> vector<8x8xf32>
    %171 = arith.truncf %170 : vector<8x8xf32> to vector<8x8xbf16>
    %172 = vector.extract_strided_slice %8 {offsets = [24, 0], sizes = [8, 32], strides = [1, 1]} : vector<32x32xbf16> to vector<8x32xbf16>
    %cst_52 = arith.constant dense<0.000000e+00> : vector<8x32xf32>
    %173 = tpu.matmul %171, %172, %cst_52 {dimension_numbers = #tpu.dot_dimension_numbers<[1], [0], [0], [1], [0, 0, 1, 1], [], []>} : vector<8x8xbf16>, vector<8x32xbf16>, vector<8x32xf32> -> vector<8x32xf32>
    %174 = arith.addf %154, %173 : vector<8x32xf32>
    %175 = vector.broadcast %9 : vector<1x32xf32> to vector<8x32xf32>
    %176 = arith.addf %174, %175 : vector<8x32xf32>
    %c8 = arith.constant 8 : index
    %c0_53 = arith.constant 0 : index
    %177 = vector.load %arg6[%c8, %c0_53] : memref<16x32xf32, #tpu.memory_space<vmem>>, vector<8x32xf32>
    tpu.vector_store %arg6[%c8, %c0_53], %176 {strides = array<i32>} : memref<16x32xf32, #tpu.memory_space<vmem>>, vector<8x32xf32>,
    return
  }
  func.func @transform_0(%arg0: i32) -> (i32, i32) {
    %c0_i32 = arith.constant 0 : i32
    %c0_i32_0 = arith.constant 0 : i32
    %c0_i32_1 = arith.constant 0 : i32
    return %c0_i32, %c0_i32_0 : i32, i32
  }
  func.func @transform_1(%arg0: i32) -> (i32, i32) {
    %c0_i32 = arith.constant 0 : i32
    %c0_i32_0 = arith.constant 0 : i32
    %c0_i32_1 = arith.constant 0 : i32
    return %c0_i32, %c0_i32_0 : i32, i32
  }
  func.func @transform_2(%arg0: i32) -> (i32, i32) {
    %c0_i32 = arith.constant 0 : i32
    %c0_i32_0 = arith.constant 0 : i32
    %c0_i32_1 = arith.constant 0 : i32
    return %c0_i32, %c0_i32_0 : i32, i32
  }
  func.func @transform_3(%arg0: i32) -> (i32, i32) {
    %c0_i32 = arith.constant 0 : i32
    %c0_i32_0 = arith.constant 0 : i32
    %c0_i32_1 = arith.constant 0 : i32
    return %c0_i32, %c0_i32_0 : i32, i32
  }
  func.func @transform_4(%arg0: i32) -> (i32, i32) {
    %c0_i32 = arith.constant 0 : i32
    %c0_i32_0 = arith.constant 0 : i32
    %c0_i32_1 = arith.constant 0 : i32
    return %c0_i32, %c0_i32_0 : i32, i32
  }
  func.func @transform_5(%arg0: i32) -> (i32, i32) {
    %c0_i32 = arith.constant 0 : i32
    %c0_i32_0 = arith.constant 0 : i32
    %c0_i32_1 = arith.constant 0 : i32
    return %c0_i32, %c0_i32_0 : i32, i32
  }
}

</mosaic_0001>

<llo_original>
// kernel: tpu_custom_call.1
$region0: #{tpu_custom_call.1}
  #allocation0 [shape = 'u32[]', space=smem, size = 0x4, offset = 0x4, fixed_abs, tag = 'smem constant byte address 0x4 - core index']
  #allocation1 [shape = 'u32[144,128]{1,0:T(1,128)}', space=vmem, size = 0x12000, scoped, tag = 'internal scratch']
  %s0 = inlined_call_operand.hbm [shape: f32[16,32], index: 0, kind: input, shape index: {}]
  %s1 = inlined_call_operand.hbm [shape: bf16[32,96], index: 1, kind: input, shape index: {}]
  %s2 = inlined_call_operand.vmem [shape: f32[1,96], index: 2, kind: input, shape index: {}]
  %s3 = inlined_call_operand.hbm [shape: bf16[32,32], index: 3, kind: input, shape index: {}]
  %s4 = inlined_call_operand.vmem [shape: f32[1,32], index: 4, kind: input, shape index: {}]
  %s5 = inlined_call_operand.hbm [shape: f32[16,32], index: 5, kind: output, shape index: {}]
  %s6 = sld [smem:[#allocation0]]
  $region42: #{tpu_custom_call.1} parent=0
    _
  %s8 = ssub.s32 1, %s6
  %s9 = scalar_select 0, %s8, %s6
  $region1: #{tpu_custom_call.1} parent=0
    #allocation2 [shape = 'u8[8192]{0}', space=vmem, size = 0x2000, scoped, tag = 'input window, operand 0, single buffered']
    #allocation3 [shape = 's32[1]{0}', space=sflag, size = 0x4, scoped, tag = 'scoped memory for tpu_custom_call.1']
    #allocation4 [shape = 's32[1]{0}', space=sflag, size = 0x4, scoped, tag = 'scoped memory for tpu_custom_call.1']
    #allocation5 [shape = 'u8[8192]{0}', space=vmem, size = 0x2000, scoped, tag = 'input window, operand 1, single buffered']
    #allocation6 [shape = 's32[1]{0}', space=sflag, size = 0x4, scoped, tag = 'scoped memory for tpu_custom_call.1']
    #allocation7 [shape = 'u8[8192]{0}', space=vmem, size = 0x2000, scoped, tag = 'input window, operand 3, single buffered']
    #allocation8 [shape = 'u8[8192]{0}', space=vmem, size = 0x2000, scoped, tag = 'output window, operand 0, single buffered']
    %10 = vsyncpa [#allocation3], 0
    %11 = vsyncpa [#allocation6], 0
    %12 = vsyncpa [#allocation4], 0
    // Predicated region
    $region2: #{tpu_custom_call.1} parent=1 // pred_check
      _
    $region3: #{tpu_custom_call.1} parent=1 // pred_check_branch
      %14 = sbr.rel (0) target = $region5
    $region4: #{tpu_custom_call.1} parent=1 // pred_region
      %s16 = ssub.s32 256, 256
      %17 = vsyncadd [#allocation3], %s16
      %s18 = sshll.u32 [#allocation2], 4
      %s19 = int_to_ptr.vmem [resolvable:$true] %s18
      %24 = dma.hbm_to_vmem [thread:$0]  %s0, 256, %s19, [#allocation3], 128, 128, 8
    $region5: #{tpu_custom_call.1} parent=1 // pred_fallthru
      _
    // Predicated region
    $region6: #{tpu_custom_call.1} parent=1 // pred_check
      _
    $region7: #{tpu_custom_call.1} parent=1 // pred_check_branch
      %26 = sbr.rel (0) target = $region9
    $region8: #{tpu_custom_call.1} parent=1 // pred_region
      %s28 = ssub.s32 256, 256
      %29 = vsyncadd [#allocation6], %s28
      %s30 = sshll.u32 [#allocation5], 4
      %s31 = int_to_ptr.vmem [resolvable:$true] %s30
      %36 = dma.hbm_to_vmem [thread:$0]  %s1, 256, %s31, [#allocation6], 64, 64, 4
    $region9: #{tpu_custom_call.1} parent=1 // pred_fallthru
      _
    // Predicated region
    $region10: #{tpu_custom_call.1} parent=1 // pred_check
      _
    $region11: #{tpu_custom_call.1} parent=1 // pred_check_branch
      %38 = sbr.rel (0) target = $region13
    $region12: #{tpu_custom_call.1} parent=1 // pred_region
      _
    $region13: #{tpu_custom_call.1} parent=1 // pred_fallthru
      _
    // Predicated region
    $region14: #{tpu_custom_call.1} parent=1 // pred_check
      _
    $region15: #{tpu_custom_call.1} parent=1 // pred_check_branch
      %40 = sbr.rel (0) target = $region17
    $region16: #{tpu_custom_call.1} parent=1 // pred_region
      %s42 = ssub.s32 256, 256
      %43 = vsyncadd [#allocation6], %s42
      %s44 = sshll.u32 [#allocation7], 4
      %s45 = int_to_ptr.vmem [resolvable:$true] %s44
      %50 = dma.hbm_to_vmem [thread:$0]  %s3, 256, %s45, [#allocation6], 64, 64, 4
    $region17: #{tpu_custom_call.1} parent=1 // pred_fallthru
      _
    // Predicated region
    $region18: #{tpu_custom_call.1} parent=1 // pred_check
      _
    $region19: #{tpu_custom_call.1} parent=1 // pred_check_branch
      %52 = sbr.rel (0) target = $region21
    $region20: #{tpu_custom_call.1} parent=1 // pred_region
      _
    $region21: #{tpu_custom_call.1} parent=1 // pred_fallthru
      _
    // Predicated region
    $region22: #{tpu_custom_call.1} parent=1 // pred_check
      _
    $region23: #{tpu_custom_call.1} parent=1 // pred_check_branch
      %54 = sbr.rel (0) target = $region25
    $region24: #{tpu_custom_call.1} parent=1 // pred_region
      %55 = dma.done [#allocation3], 256
    $region25: #{tpu_custom_call.1} parent=1 // pred_fallthru
      _
    // Predicated region
    $region26: #{tpu_custom_call.1} parent=1 // pred_check
      _
    $region27: #{tpu_custom_call.1} parent=1 // pred_check_branch
      %57 = sbr.rel (0) target = $region29
    $region28: #{tpu_custom_call.1} parent=1 // pred_region
      %58 = dma.done [#allocation6], 256
    $region29: #{tpu_custom_call.1} parent=1 // pred_fallthru
      _
    // Predicated region
    $region30: #{tpu_custom_call.1} parent=1 // pred_check
      _
    $region31: #{tpu_custom_call.1} parent=1 // pred_check_branch
      %60 = sbr.rel (0) target = $region33
    $region32: #{tpu_custom_call.1} parent=1 // pred_region
      %61 = dma.done [#allocation6], 256
    $region33: #{tpu_custom_call.1} parent=1 // pred_fallthru
      _
    %v63 = vld [vmem:[#allocation2] sm:$0xff]
    %v64 = vld [vmem:[#allocation2 + $0x8] sm:$0xff]
    %v65 = vpack.c.bf16 %v64, %v63
    %v66 = vld [vmem:[#allocation5] sm:$0xf]
    %v67 = vld [vmem:[#allocation5 + $0x4] sm:$0xf]
    %v68 = vld [vmem:[#allocation5 + $0x8] sm:$0xf]
    %v69 = vld [vmem:[#allocation5 + $0xc] sm:$0xf]
    %v70 = vld [vmem:[%s2] sm:$0x1]
    %v72 = vlaneseq
    %v73 = vshrl.u32 %v72, 7
    %v74 = vsub.s32 0, %v73
    %v75 = vrot.slane %v70, %v74
    %v81 = vunpack.c.l.b16 %v66
    %v82 = vunpack.c.l.b16 %v67
    %v83 = vunpack.c.l.b16 %v68
    %v84 = vunpack.c.l.b16 %v69
    %v85 = vpack.c.b16 %v82, %v81
    %v86 = vpack.c.b16 %v84, %v83
    %vm89 = vcmask 261120
    %v91 = vsel %vm89, %v65, 0
    %93 = vmatprep.subr.bf16.mxu0 0
    %94 = vmatpush1.bf16.msra.mxu0 %v85
    %95 = vmatprep.subr.bf16.mxu0 0
    %96 = vmatpush1.bf16.msra.mxu0 %v86
    %97 = vmatprep.subr.bf16.mxu0 0
    %98 = vmatpush1.bf16.msra.mxu0 0
    %99 = vmatprep.subr.bf16.mxu0 0
    %100 = vmatpush1.bf16.msra.mxu0 0
    %101 = vmatprep.subr.bf16.mxu0 0
    %102 = vmatpush1.bf16.msra.mxu0 0
    %103 = vmatprep.subr.bf16.mxu0 0
    %104 = vmatpush1.bf16.msra.mxu0 0
    %105 = vmatprep.subr.bf16.mxu0 0
    %106 = vmatpush1.bf16.msra.mxu0 0
    %107 = vmatprep.subr.bf16.mxu0 0
    %108 = vmatpush1.bf16.msra.mxu0 0
    %109 = vmatprep.subr.bf16.mxu0 0
    %110 = vmatpush1.bf16.msra.mxu0 0
    %111 = vmatprep.subr.bf16.mxu0 0
    %112 = vmatpush1.bf16.msra.mxu0 0
    %113 = vmatprep.subr.bf16.mxu0 0
    %114 = vmatpush1.bf16.msra.mxu0 0
    %115 = vmatprep.subr.bf16.mxu0 0
    %116 = vmatpush1.bf16.msra.mxu0 0
    %117 = vmatprep.subr.bf16.mxu0 0
    %118 = vmatpush1.bf16.msra.mxu0 0
    %119 = vmatprep.subr.bf16.mxu0 0
    %120 = vmatpush1.bf16.msra.mxu0 0
    %121 = vmatprep.subr.bf16.mxu0 0
    %122 = vmatpush1.bf16.msra.mxu0 0
    %123 = vmatprep.subr.bf16.mxu0 0
    %124 = vmatpush1.bf16.msra.mxu0 0
    %125 = vmatprep.mubr.bf16.mxu0 0
    %126 = vmatmul.mubr.bf16.gmra.mrb[0].mxu0 %v91
    %v127 = vpop.f32.mrb[0].mxu0
    %v128 = vadd.f32 %v75, %v127
    %v129 = vpop.f32.mrb[0].mxu0
    %v130 = vpop.f32.mrb[0].mxu0
    %v131 = vadd.f32 %v75, %v130
    %v132 = vpop.f32.mrb[0].mxu0
    %133 = vdwg.mxu0
    %v134 = vpack.c.bf16 %v131, %v128
    %v135 = vld [vmem:[#allocation7] sm:$0xf]
    %v136 = vld [vmem:[#allocation7 + $0x4] sm:$0xf]
    %v137 = vld [vmem:[#allocation7 + $0x8] sm:$0xf]
    %v138 = vld [vmem:[#allocation7 + $0xc] sm:$0xf]
    %v139 = vld [vmem:[%s4] sm:$0x1]
    %141 = vrot.lane.b32.xlu0 %v134, 96
    %v142 = vpop.permute.xlu0 %141
    %vm143 = vcmask 64512
    %v145 = vsel %vm143, %v134, 0
    %v148 = vsel %vm143, %v142, 0
    %150 = vmatprep.subr.bf16.mxu0 0
    %151 = vmatpush1.bf16.xpose.msra.mxu0 %v148
    %152 = vmatprep.subr.bf16.mxu0 0
    %153 = vmatpush1.bf16.xpose.msra.mxu0 0
    %154 = vmatprep.subr.bf16.mxu0 0
    %155 = vmatpush1.bf16.xpose.msra.mxu0 0
    %156 = vmatprep.subr.bf16.mxu0 0
    %157 = vmatpush1.bf16.xpose.msra.mxu0 0
    %158 = vmatprep.subr.bf16.mxu0 0
    %159 = vmatpush1.bf16.xpose.msra.mxu0 0
    %160 = vmatprep.subr.bf16.mxu0 0
    %161 = vmatpush1.bf16.xpose.msra.mxu0 0
    %162 = vmatprep.subr.bf16.mxu0 0
    %163 = vmatpush1.bf16.xpose.msra.mxu0 0
    %164 = vmatprep.subr.bf16.mxu0 0
    %165 = vmatpush1.bf16.xpose.msra.mxu0 0
    %166 = vmatprep.subr.bf16.mxu0 0
    %167 = vmatpush1.bf16.xpose.msra.mxu0 0
    %168 = vmatprep.subr.bf16.mxu0 0
    %169 = vmatpush1.bf16.xpose.msra.mxu0 0
    %170 = vmatprep.subr.bf16.mxu0 0
    %171 = vmatpush1.bf16.xpose.msra.mxu0 0
    %172 = vmatprep.subr.bf16.mxu0 0
    %173 = vmatpush1.bf16.xpose.msra.mxu0 0
    %174 = vmatprep.subr.bf16.mxu0 0
    %175 = vmatpush1.bf16.xpose.msra.mxu0 0
    %176 = vmatprep.subr.bf16.mxu0 0
    %177 = vmatpush1.bf16.xpose.msra.mxu0 0
    %178 = vmatprep.subr.bf16.mxu0 0
    %179 = vmatpush1.bf16.xpose.msra.mxu0 0
    %180 = vmatprep.subr.bf16.mxu0 0
    %181 = vmatpush1.bf16.xpose.msra.mxu0 0
    %182 = vmatprep.mubr.bf16.mxu0 0
    %183 = vmatmul.mubr.bf16.gmra.mrb[0].mxu0 %v145
    %v184 = vpop.f32.mrb[0].mxu0
    %v185 = vadd.f32 0.0, %v184
    %v186 = vpop.f32.mrb[0].mxu0
    %v187 = vpop.f32.mrb[0].mxu0
    %v188 = vpop.f32.mrb[0].mxu0
    %189 = vdwg.mxu0
    %v190 = vsel %vm143, %v185, -inf
    %191 = vmax.xlane.f32.xlu0 %v190
    %v192 = vpop.xlane.xlu0 %191
    %v193 = vsub.f32 %v185, %v192
    %v194 = vmul.f32 %v193, 1.442695
    %v195 = vpow.pop %v194
    %v196 = vsel %vm143, %v195, 0.0
    %197 = vadd.xlane.f32.xlu0 %v196
    %v198 = vpop.xlane.xlu0 %197
    %v199 = vrcp.pop %v198
    %v200 = vmul.f32 %v195, %v199
    %v201 = vpack.c.bf16 %v200, %v200
    %202 = vrot.lane.b32.xlu0 %v134, 64
    %v203 = vpop.permute.xlu0 %202
    %v205 = vsel %vm143, %v201, 0
    %vm207 = vcmask 1043456
    %v209 = vsel %vm207, %v203, 0
    %211 = vmatprep.subr.bf16.mxu0 0
    %212 = vmatpush1.bf16.msra.mxu0 %v209
    %213 = vmatprep.subr.bf16.mxu0 0
    %214 = vmatpush1.bf16.msra.mxu0 0
    %215 = vmatprep.subr.bf16.mxu0 0
    %216 = vmatpush1.bf16.msra.mxu0 0
    %217 = vmatprep.subr.bf16.mxu0 0
    %218 = vmatpush1.bf16.msra.mxu0 0
    %219 = vmatprep.subr.bf16.mxu0 0
    %220 = vmatpush1.bf16.msra.mxu0 0
    %221 = vmatprep.subr.bf16.mxu0 0
    %222 = vmatpush1.bf16.msra.mxu0 0
    %223 = vmatprep.subr.bf16.mxu0 0
    %224 = vmatpush1.bf16.msra.mxu0 0
    %225 = vmatprep.subr.bf16.mxu0 0
    %226 = vmatpush1.bf16.msra.mxu0 0
    %227 = vmatprep.subr.bf16.mxu0 0
    %228 = vmatpush1.bf16.msra.mxu0 0
    %229 = vmatprep.subr.bf16.mxu0 0
    %230 = vmatpush1.bf16.msra.mxu0 0
    %231 = vmatprep.subr.bf16.mxu0 0
    %232 = vmatpush1.bf16.msra.mxu0 0
    %233 = vmatprep.subr.bf16.mxu0 0
    %234 = vmatpush1.bf16.msra.mxu0 0
    %235 = vmatprep.subr.bf16.mxu0 0
    %236 = vmatpush1.bf16.msra.mxu0 0
    %237 = vmatprep.subr.bf16.mxu0 0
    %238 = vmatpush1.bf16.msra.mxu0 0
    %239 = vmatprep.subr.bf16.mxu0 0
    %240 = vmatpush1.bf16.msra.mxu0 0
    %241 = vmatprep.subr.bf16.mxu0 0
    %242 = vmatpush1.bf16.msra.mxu0 0
    %243 = vmatprep.mubr.bf16.mxu0 0
    %244 = vmatmul.mubr.bf16.gmra.mrb[0].mxu0 %v205
    %v245 = vpop.f32.mrb[0].mxu0
    %v246 = vadd.f32 0.0, %v245
    %v247 = vpop.f32.mrb[0].mxu0
    %v248 = vpop.f32.mrb[0].mxu0
    %v249 = vpop.f32.mrb[0].mxu0
    %250 = vdwg.mxu0
    %v251 = vpack.c.bf16 %v246, %v246
    %252 = vrot.lane.b32.xlu0 %v134, 120
    %v253 = vpop.permute.xlu0 %252
    %254 = vrot.lane.b32.xlu0 %v134, 88
    %v255 = vpop.permute.xlu0 %254
    %v257 = vsel %vm143, %v253, 0
    %v260 = vsel %vm143, %v255, 0
    %262 = vmatprep.subr.bf16.mxu0 0
    %263 = vmatpush1.bf16.xpose.msra.mxu0 %v260
    %264 = vmatprep.subr.bf16.mxu0 0
    %265 = vmatpush1.bf16.xpose.msra.mxu0 0
    %266 = vmatprep.subr.bf16.mxu0 0
    %267 = vmatpush1.bf16.xpose.msra.mxu0 0
    %268 = vmatprep.subr.bf16.mxu0 0
    %269 = vmatpush1.bf16.xpose.msra.mxu0 0
    %270 = vmatprep.subr.bf16.mxu0 0
    %271 = vmatpush1.bf16.xpose.msra.mxu0 0
    %272 = vmatprep.subr.bf16.mxu0 0
    %273 = vmatpush1.bf16.xpose.msra.mxu0 0
    %274 = vmatprep.subr.bf16.mxu0 0
    %275 = vmatpush1.bf16.xpose.msra.mxu0 0
    %276 = vmatprep.subr.bf16.mxu0 0
    %277 = vmatpush1.bf16.xpose.msra.mxu0 0
    %278 = vmatprep.subr.bf16.mxu0 0
    %279 = vmatpush1.bf16.xpose.msra.mxu0 0
    %280 = vmatprep.subr.bf16.mxu0 0
    %281 = vmatpush1.bf16.xpose.msra.mxu0 0
    %282 = vmatprep.subr.bf16.mxu0 0
    %283 = vmatpush1.bf16.xpose.msra.mxu0 0
    %284 = vmatprep.subr.bf16.mxu0 0
    %285 = vmatpush1.bf16.xpose.msra.mxu0 0
    %286 = vmatprep.subr.bf16.mxu0 0
    %287 = vmatpush1.bf16.xpose.msra.mxu0 0
    %288 = vmatprep.subr.bf16.mxu0 0
    %289 = vmatpush1.bf16.xpose.msra.mxu0 0
    %290 = vmatprep.subr.bf16.mxu0 0
    %291 = vmatpush1.bf16.xpose.msra.mxu0 0
    %292 = vmatprep.subr.bf16.mxu0 0
    %293 = vmatpush1.bf16.xpose.msra.mxu0 0
    %294 = vmatprep.mubr.bf16.mxu0 0
    %295 = vmatmul.mubr.bf16.gmra.mrb[0].mxu0 %v257
    %v296 = vpop.f32.mrb[0].mxu0
    %v297 = vadd.f32 0.0, %v296
    %v298 = vpop.f32.mrb[0].mxu0
    %v299 = vpop.f32.mrb[0].mxu0
    %v300 = vpop.f32.mrb[0].mxu0
    %301 = vdwg.mxu0
    %v302 = vsel %vm143, %v297, -inf
    %303 = vmax.xlane.f32.xlu0 %v302
    %v304 = vpop.xlane.xlu0 %303
    %v305 = vsub.f32 %v297, %v304
    %v306 = vmul.f32 %v305, 1.442695
    %v307 = vpow.pop %v306
    %v308 = vsel %vm143, %v307, 0.0
    %309 = vadd.xlane.f32.xlu0 %v308
    %v310 = vpop.xlane.xlu0 %309
    %v311 = vrcp.pop %v310
    %v312 = vmul.f32 %v307, %v311
    %v313 = vpack.c.bf16 %v312, %v312
    %314 = vrot.lane.b32.xlu0 %v134, 56
    %v315 = vpop.permute.xlu0 %314
    %v317 = vsel %vm143, %v313, 0
    %v320 = vsel %vm207, %v315, 0
    %322 = vmatprep.subr.bf16.mxu0 0
    %323 = vmatpush1.bf16.msra.mxu0 %v320
    %324 = vmatprep.subr.bf16.mxu0 0
    %325 = vmatpush1.bf16.msra.mxu0 0
    %326 = vmatprep.subr.bf16.mxu0 0
    %327 = vmatpush1.bf16.msra.mxu0 0
    %328 = vmatprep.subr.bf16.mxu0 0
    %329 = vmatpush1.bf16.msra.mxu0 0
    %330 = vmatprep.subr.bf16.mxu0 0
    %331 = vmatpush1.bf16.msra.mxu0 0
    %332 = vmatprep.subr.bf16.mxu0 0
    %333 = vmatpush1.bf16.msra.mxu0 0
    %334 = vmatprep.subr.bf16.mxu0 0
    %335 = vmatpush1.bf16.msra.mxu0 0
    %336 = vmatprep.subr.bf16.mxu0 0
    %337 = vmatpush1.bf16.msra.mxu0 0
    %338 = vmatprep.subr.bf16.mxu0 0
    %339 = vmatpush1.bf16.msra.mxu0 0
    %340 = vmatprep.subr.bf16.mxu0 0
    %341 = vmatpush1.bf16.msra.mxu0 0
    %342 = vmatprep.subr.bf16.mxu0 0
    %343 = vmatpush1.bf16.msra.mxu0 0
    %344 = vmatprep.subr.bf16.mxu0 0
    %345 = vmatpush1.bf16.msra.mxu0 0
    %346 = vmatprep.subr.bf16.mxu0 0
    %347 = vmatpush1.bf16.msra.mxu0 0
    %348 = vmatprep.subr.bf16.mxu0 0
    %349 = vmatpush1.bf16.msra.mxu0 0
    %350 = vmatprep.subr.bf16.mxu0 0
    %351 = vmatpush1.bf16.msra.mxu0 0
    %352 = vmatprep.subr.bf16.mxu0 0
    %353 = vmatpush1.bf16.msra.mxu0 0
    %354 = vmatprep.mubr.bf16.mxu0 0
    %355 = vmatmul.mubr.bf16.gmra.mrb[0].mxu0 %v317
    %v356 = vpop.f32.mrb[0].mxu0
    %v357 = vadd.f32 0.0, %v356
    %v358 = vpop.f32.mrb[0].mxu0
    %v359 = vpop.f32.mrb[0].mxu0
    %v360 = vpop.f32.mrb[0].mxu0
    %361 = vdwg.mxu0
    %v362 = vpack.c.bf16 %v357, %v357
    %v364 = vsel %vm143, %v362, 0
    %v367 = vsel %vm207, %v136, 0
    %369 = vmatprep.subr.bf16.mxu0 0
    %370 = vmatpush1.bf16.msra.mxu0 %v367
    %371 = vmatprep.subr.bf16.mxu0 0
    %372 = vmatpush1.bf16.msra.mxu0 0
    %373 = vmatprep.subr.bf16.mxu0 0
    %374 = vmatpush1.bf16.msra.mxu0 0
    %375 = vmatprep.subr.bf16.mxu0 0
    %376 = vmatpush1.bf16.msra.mxu0 0
    %377 = vmatprep.subr.bf16.mxu0 0
    %378 = vmatpush1.bf16.msra.mxu0 0
    %379 = vmatprep.subr.bf16.mxu0 0
    %380 = vmatpush1.bf16.msra.mxu0 0
    %381 = vmatprep.subr.bf16.mxu0 0
    %382 = vmatpush1.bf16.msra.mxu0 0
    %383 = vmatprep.subr.bf16.mxu0 0
    %384 = vmatpush1.bf16.msra.mxu0 0
    %385 = vmatprep.subr.bf16.mxu0 0
    %386 = vmatpush1.bf16.msra.mxu0 0
    %387 = vmatprep.subr.bf16.mxu0 0
    %388 = vmatpush1.bf16.msra.mxu0 0
    %389 = vmatprep.subr.bf16.mxu0 0
    %390 = vmatpush1.bf16.msra.mxu0 0
    %391 = vmatprep.subr.bf16.mxu0 0
    %392 = vmatpush1.bf16.msra.mxu0 0
    %393 = vmatprep.subr.bf16.mxu0 0
    %394 = vmatpush1.bf16.msra.mxu0 0
    %395 = vmatprep.subr.bf16.mxu0 0
    %396 = vmatpush1.bf16.msra.mxu0 0
    %397 = vmatprep.subr.bf16.mxu0 0
    %398 = vmatpush1.bf16.msra.mxu0 0
    %399 = vmatprep.subr.bf16.mxu0 0
    %400 = vmatpush1.bf16.msra.mxu0 0
    %401 = vmatprep.mubr.bf16.mxu0 0
    %402 = vmatmul.mubr.bf16.gmra.mrb[0].mxu0 %v364
    %v403 = vpop.f32.mrb[0].mxu0
    %v404 = vadd.f32 0.0, %v403
    %v405 = vpop.f32.mrb[0].mxu0
    %v406 = vpop.f32.mrb[0].mxu0
    %v407 = vpop.f32.mrb[0].mxu0
    %408 = vdwg.mxu0
    %v410 = vsel %vm143, %v251, 0
    %v413 = vsel %vm207, %v135, 0
    %415 = vmatprep.subr.bf16.mxu0 0
    %416 = vmatpush1.bf16.msra.mxu0 %v413
    %417 = vmatprep.subr.bf16.mxu0 0
    %418 = vmatpush1.bf16.msra.mxu0 0
    %419 = vmatprep.subr.bf16.mxu0 0
    %420 = vmatpush1.bf16.msra.mxu0 0
    %421 = vmatprep.subr.bf16.mxu0 0
    %422 = vmatpush1.bf16.msra.mxu0 0
    %423 = vmatprep.subr.bf16.mxu0 0
    %424 = vmatpush1.bf16.msra.mxu0 0
    %425 = vmatprep.subr.bf16.mxu0 0
    %426 = vmatpush1.bf16.msra.mxu0 0
    %427 = vmatprep.subr.bf16.mxu0 0
    %428 = vmatpush1.bf16.msra.mxu0 0
    %429 = vmatprep.subr.bf16.mxu0 0
    %430 = vmatpush1.bf16.msra.mxu0 0
    %431 = vmatprep.subr.bf16.mxu0 0
    %432 = vmatpush1.bf16.msra.mxu0 0
    %433 = vmatprep.subr.bf16.mxu0 0
    %434 = vmatpush1.bf16.msra.mxu0 0
    %435 = vmatprep.subr.bf16.mxu0 0
    %436 = vmatpush1.bf16.msra.mxu0 0
    %437 = vmatprep.subr.bf16.mxu0 0
    %438 = vmatpush1.bf16.msra.mxu0 0
    %439 = vmatprep.subr.bf16.mxu0 0
    %440 = vmatpush1.bf16.msra.mxu0 0
    %441 = vmatprep.subr.bf16.mxu0 0
    %442 = vmatpush1.bf16.msra.mxu0 0
    %443 = vmatprep.subr.bf16.mxu0 0
    %444 = vmatpush1.bf16.msra.mxu0 0
    %445 = vmatprep.subr.bf16.mxu0 0
    %446 = vmatpush1.bf16.msra.mxu0 0
    %447 = vmatprep.mubr.bf16.mxu0 0
    %448 = vmatmul.mubr.bf16.gmra.mrb[0].mxu0 %v410
    %v449 = vpop.f32.mrb[0].mxu0
    %v450 = vadd.f32 %v404, %v449
    %v451 = vpop.f32.mrb[0].mxu0
    %v452 = vpop.f32.mrb[0].mxu0
    %v453 = vpop.f32.mrb[0].mxu0
    %454 = vdwg.mxu0
    %455 = vrot.lane.b32.xlu0 %v134, 112
    %v456 = vpop.permute.xlu0 %455
    %457 = vrot.lane.b32.xlu0 %v134, 80
    %v458 = vpop.permute.xlu0 %457
    %v460 = vsel %vm143, %v456, 0
    %v463 = vsel %vm143, %v458, 0
    %465 = vmatprep.subr.bf16.mxu0 0
    %466 = vmatpush1.bf16.xpose.msra.mxu0 %v463
    %467 = vmatprep.subr.bf16.mxu0 0
    %468 = vmatpush1.bf16.xpose.msra.mxu0 0
    %469 = vmatprep.subr.bf16.mxu0 0
    %470 = vmatpush1.bf16.xpose.msra.mxu0 0
    %471 = vmatprep.subr.bf16.mxu0 0
    %472 = vmatpush1.bf16.xpose.msra.mxu0 0
    %473 = vmatprep.subr.bf16.mxu0 0
    %474 = vmatpush1.bf16.xpose.msra.mxu0 0
    %475 = vmatprep.subr.bf16.mxu0 0
    %476 = vmatpush1.bf16.xpose.msra.mxu0 0
    %477 = vmatprep.subr.bf16.mxu0 0
    %478 = vmatpush1.bf16.xpose.msra.mxu0 0
    %479 = vmatprep.subr.bf16.mxu0 0
    %480 = vmatpush1.bf16.xpose.msra.mxu0 0
    %481 = vmatprep.subr.bf16.mxu0 0
    %482 = vmatpush1.bf16.xpose.msra.mxu0 0
    %483 = vmatprep.subr.bf16.mxu0 0
    %484 = vmatpush1.bf16.xpose.msra.mxu0 0
    %485 = vmatprep.subr.bf16.mxu0 0
    %486 = vmatpush1.bf16.xpose.msra.mxu0 0
    %487 = vmatprep.subr.bf16.mxu0 0
    %488 = vmatpush1.bf16.xpose.msra.mxu0 0
    %489 = vmatprep.subr.bf16.mxu0 0
    %490 = vmatpush1.bf16.xpose.msra.mxu0 0
    %491 = vmatprep.subr.bf16.mxu0 0
    %492 = vmatpush1.bf16.xpose.msra.mxu0 0
    %493 = vmatprep.subr.bf16.mxu0 0
    %494 = vmatpush1.bf16.xpose.msra.mxu0 0
    %495 = vmatprep.subr.bf16.mxu0 0
    %496 = vmatpush1.bf16.xpose.msra.mxu0 0
    %497 = vmatprep.mubr.bf16.mxu0 0
    %498 = vmatmul.mubr.bf16.gmra.mrb[0].mxu0 %v460
    %v499 = vpop.f32.mrb[0].mxu0
    %v500 = vadd.f32 0.0, %v499
    %v501 = vpop.f32.mrb[0].mxu0
    %v502 = vpop.f32.mrb[0].mxu0
    %v503 = vpop.f32.mrb[0].mxu0
    %504 = vdwg.mxu0
    %v505 = vsel %vm143, %v500, -inf
    %506 = vmax.xlane.f32.xlu0 %v505
    %v507 = vpop.xlane.xlu0 %506
    %v508 = vsub.f32 %v500, %v507
    %v509 = vmul.f32 %v508, 1.442695
    %v510 = vpow.pop %v509
    %v511 = vsel %vm143, %v510, 0.0
    %512 = vadd.xlane.f32.xlu0 %v511
    %v513 = vpop.xlane.xlu0 %512
    %v514 = vrcp.pop %v513
    %v515 = vmul.f32 %v510, %v514
    %v516 = vpack.c.bf16 %v515, %v515
    %517 = vrot.lane.b32.xlu0 %v134, 48
    %v518 = vpop.permute.xlu0 %517
    %v520 = vsel %vm143, %v516, 0
    %v523 = vsel %vm207, %v518, 0
    %525 = vmatprep.subr.bf16.mxu0 0
    %526 = vmatpush1.bf16.msra.mxu0 %v523
    %527 = vmatprep.subr.bf16.mxu0 0
    %528 = vmatpush1.bf16.msra.mxu0 0
    %529 = vmatprep.subr.bf16.mxu0 0
    %530 = vmatpush1.bf16.msra.mxu0 0
    %531 = vmatprep.subr.bf16.mxu0 0
    %532 = vmatpush1.bf16.msra.mxu0 0
    %533 = vmatprep.subr.bf16.mxu0 0
    %534 = vmatpush1.bf16.msra.mxu0 0
    %535 = vmatprep.subr.bf16.mxu0 0
    %536 = vmatpush1.bf16.msra.mxu0 0
    %537 = vmatprep.subr.bf16.mxu0 0
    %538 = vmatpush1.bf16.msra.mxu0 0
    %539 = vmatprep.subr.bf16.mxu0 0
    %540 = vmatpush1.bf16.msra.mxu0 0
    %541 = vmatprep.subr.bf16.mxu0 0
    %542 = vmatpush1.bf16.msra.mxu0 0
    %543 = vmatprep.subr.bf16.mxu0 0
    %544 = vmatpush1.bf16.msra.mxu0 0
    %545 = vmatprep.subr.bf16.mxu0 0
    %546 = vmatpush1.bf16.msra.mxu0 0
    %547 = vmatprep.subr.bf16.mxu0 0
    %548 = vmatpush1.bf16.msra.mxu0 0
    %549 = vmatprep.subr.bf16.mxu0 0
    %550 = vmatpush1.bf16.msra.mxu0 0
    %551 = vmatprep.subr.bf16.mxu0 0
    %552 = vmatpush1.bf16.msra.mxu0 0
    %553 = vmatprep.subr.bf16.mxu0 0
    %554 = vmatpush1.bf16.msra.mxu0 0
    %555 = vmatprep.subr.bf16.mxu0 0
    %556 = vmatpush1.bf16.msra.mxu0 0
    %557 = vmatprep.mubr.bf16.mxu0 0
    %558 = vmatmul.mubr.bf16.gmra.mrb[0].mxu0 %v520
    %v559 = vpop.f32.mrb[0].mxu0
    %v560 = vadd.f32 0.0, %v559
    %v561 = vpop.f32.mrb[0].mxu0
    %v562 = vpop.f32.mrb[0].mxu0
    %v563 = vpop.f32.mrb[0].mxu0
    %564 = vdwg.mxu0
    %v565 = vpack.c.bf16 %v560, %v560
    %v567 = vsel %vm143, %v565, 0
    %v570 = vsel %vm207, %v137, 0
    %572 = vmatprep.subr.bf16.mxu0 0
    %573 = vmatpush1.bf16.msra.mxu0 %v570
    %574 = vmatprep.subr.bf16.mxu0 0
    %575 = vmatpush1.bf16.msra.mxu0 0
    %576 = vmatprep.subr.bf16.mxu0 0
    %577 = vmatpush1.bf16.msra.mxu0 0
    %578 = vmatprep.subr.bf16.mxu0 0
    %579 = vmatpush1.bf16.msra.mxu0 0
    %580 = vmatprep.subr.bf16.mxu0 0
    %581 = vmatpush1.bf16.msra.mxu0 0
    %582 = vmatprep.subr.bf16.mxu0 0
    %583 = vmatpush1.bf16.msra.mxu0 0
    %584 = vmatprep.subr.bf16.mxu0 0
    %585 = vmatpush1.bf16.msra.mxu0 0
    %586 = vmatprep.subr.bf16.mxu0 0
    %587 = vmatpush1.bf16.msra.mxu0 0
    %588 = vmatprep.subr.bf16.mxu0 0
    %589 = vmatpush1.bf16.msra.mxu0 0
    %590 = vmatprep.subr.bf16.mxu0 0
    %591 = vmatpush1.bf16.msra.mxu0 0
    %592 = vmatprep.subr.bf16.mxu0 0
    %593 = vmatpush1.bf16.msra.mxu0 0
    %594 = vmatprep.subr.bf16.mxu0 0
    %595 = vmatpush1.bf16.msra.mxu0 0
    %596 = vmatprep.subr.bf16.mxu0 0
    %597 = vmatpush1.bf16.msra.mxu0 0
    %598 = vmatprep.subr.bf16.mxu0 0
    %599 = vmatpush1.bf16.msra.mxu0 0
    %600 = vmatprep.subr.bf16.mxu0 0
    %601 = vmatpush1.bf16.msra.mxu0 0
    %602 = vmatprep.subr.bf16.mxu0 0
    %603 = vmatpush1.bf16.msra.mxu0 0
    %604 = vmatprep.mubr.bf16.mxu0 0
    %605 = vmatmul.mubr.bf16.gmra.mrb[0].mxu0 %v567
    %v606 = vpop.f32.mrb[0].mxu0
    %v607 = vadd.f32 0.0, %v606
    %v608 = vpop.f32.mrb[0].mxu0
    %v609 = vpop.f32.mrb[0].mxu0
    %v610 = vpop.f32.mrb[0].mxu0
    %611 = vdwg.mxu0
    %v612 = vadd.f32 %v450, %v607
    %613 = vrot.lane.b32.xlu0 %v134, 104
    %v614 = vpop.permute.xlu0 %613
    %615 = vrot.lane.b32.xlu0 %v134, 72
    %v616 = vpop.permute.xlu0 %615
    %v618 = vsel %vm143, %v614, 0
    %v621 = vsel %vm143, %v616, 0
    %623 = vmatprep.subr.bf16.mxu0 0
    %624 = vmatpush1.bf16.xpose.msra.mxu0 %v621
    %625 = vmatprep.subr.bf16.mxu0 0
    %626 = vmatpush1.bf16.xpose.msra.mxu0 0
    %627 = vmatprep.subr.bf16.mxu0 0
    %628 = vmatpush1.bf16.xpose.msra.mxu0 0
    %629 = vmatprep.subr.bf16.mxu0 0
    %630 = vmatpush1.bf16.xpose.msra.mxu0 0
    %631 = vmatprep.subr.bf16.mxu0 0
    %632 = vmatpush1.bf16.xpose.msra.mxu0 0
    %633 = vmatprep.subr.bf16.mxu0 0
    %634 = vmatpush1.bf16.xpose.msra.mxu0 0
    %635 = vmatprep.subr.bf16.mxu0 0
    %636 = vmatpush1.bf16.xpose.msra.mxu0 0
    %637 = vmatprep.subr.bf16.mxu0 0
    %638 = vmatpush1.bf16.xpose.msra.mxu0 0
    %639 = vmatprep.subr.bf16.mxu0 0
    %640 = vmatpush1.bf16.xpose.msra.mxu0 0
    %641 = vmatprep.subr.bf16.mxu0 0
    %642 = vmatpush1.bf16.xpose.msra.mxu0 0
    %643 = vmatprep.subr.bf16.mxu0 0
    %644 = vmatpush1.bf16.xpose.msra.mxu0 0
    %645 = vmatprep.subr.bf16.mxu0 0
    %646 = vmatpush1.bf16.xpose.msra.mxu0 0
    %647 = vmatprep.subr.bf16.mxu0 0
    %648 = vmatpush1.bf16.xpose.msra.mxu0 0
    %649 = vmatprep.subr.bf16.mxu0 0
    %650 = vmatpush1.bf16.xpose.msra.mxu0 0
    %651 = vmatprep.subr.bf16.mxu0 0
    %652 = vmatpush1.bf16.xpose.msra.mxu0 0
    %653 = vmatprep.subr.bf16.mxu0 0
    %654 = vmatpush1.bf16.xpose.msra.mxu0 0
    %655 = vmatprep.mubr.bf16.mxu0 0
    %656 = vmatmul.mubr.bf16.gmra.mrb[0].mxu0 %v618
    %v657 = vpop.f32.mrb[0].mxu0
    %v658 = vadd.f32 0.0, %v657
    %v659 = vpop.f32.mrb[0].mxu0
    %v660 = vpop.f32.mrb[0].mxu0
    %v661 = vpop.f32.mrb[0].mxu0
    %662 = vdwg.mxu0
    %v663 = vsel %vm143, %v658, -inf
    %664 = vmax.xlane.f32.xlu0 %v663
    %v665 = vpop.xlane.xlu0 %664
    %v666 = vsub.f32 %v658, %v665
    %v667 = vmul.f32 %v666, 1.442695
    %v668 = vpow.pop %v667
    %v669 = vsel %vm143, %v668, 0.0
    %670 = vadd.xlane.f32.xlu0 %v669
    %v671 = vpop.xlane.xlu0 %670
    %v672 = vrcp.pop %v671
    %v673 = vmul.f32 %v668, %v672
    %v674 = vpack.c.bf16 %v673, %v673
    %675 = vrot.lane.b32.xlu0 %v134, 40
    %v676 = vpop.permute.xlu0 %675
    %v678 = vsel %vm143, %v674, 0
    %v681 = vsel %vm207, %v676, 0
    %683 = vmatprep.subr.bf16.mxu0 0
    %684 = vmatpush1.bf16.msra.mxu0 %v681
    %685 = vmatprep.subr.bf16.mxu0 0
    %686 = vmatpush1.bf16.msra.mxu0 0
    %687 = vmatprep.subr.bf16.mxu0 0
    %688 = vmatpush1.bf16.msra.mxu0 0
    %689 = vmatprep.subr.bf16.mxu0 0
    %690 = vmatpush1.bf16.msra.mxu0 0
    %691 = vmatprep.subr.bf16.mxu0 0
    %692 = vmatpush1.bf16.msra.mxu0 0
    %693 = vmatprep.subr.bf16.mxu0 0
    %694 = vmatpush1.bf16.msra.mxu0 0
    %695 = vmatprep.subr.bf16.mxu0 0
    %696 = vmatpush1.bf16.msra.mxu0 0
    %697 = vmatprep.subr.bf16.mxu0 0
    %698 = vmatpush1.bf16.msra.mxu0 0
    %699 = vmatprep.subr.bf16.mxu0 0
    %700 = vmatpush1.bf16.msra.mxu0 0
    %701 = vmatprep.subr.bf16.mxu0 0
    %702 = vmatpush1.bf16.msra.mxu0 0
    %703 = vmatprep.subr.bf16.mxu0 0
    %704 = vmatpush1.bf16.msra.mxu0 0
    %705 = vmatprep.subr.bf16.mxu0 0
    %706 = vmatpush1.bf16.msra.mxu0 0
    %707 = vmatprep.subr.bf16.mxu0 0
    %708 = vmatpush1.bf16.msra.mxu0 0
    %709 = vmatprep.subr.bf16.mxu0 0
    %710 = vmatpush1.bf16.msra.mxu0 0
    %711 = vmatprep.subr.bf16.mxu0 0
    %712 = vmatpush1.bf16.msra.mxu0 0
    %713 = vmatprep.subr.bf16.mxu0 0
    %714 = vmatpush1.bf16.msra.mxu0 0
    %715 = vmatprep.mubr.bf16.mxu0 0
    %716 = vmatmul.mubr.bf16.gmra.mrb[0].mxu0 %v678
    %v717 = vpop.f32.mrb[0].mxu0
    %v718 = vadd.f32 0.0, %v717
    %v719 = vpop.f32.mrb[0].mxu0
    %v720 = vpop.f32.mrb[0].mxu0
    %v721 = vpop.f32.mrb[0].mxu0
    %722 = vdwg.mxu0
    %v723 = vpack.c.bf16 %v718, %v718
    %v725 = vsel %vm143, %v723, 0
    %v728 = vsel %vm207, %v138, 0
    %730 = vmatprep.subr.bf16.mxu0 0
    %731 = vmatpush1.bf16.msra.mxu0 %v728
    %732 = vmatprep.subr.bf16.mxu0 0
    %733 = vmatpush1.bf16.msra.mxu0 0
    %734 = vmatprep.subr.bf16.mxu0 0
    %735 = vmatpush1.bf16.msra.mxu0 0
    %736 = vmatprep.subr.bf16.mxu0 0
    %737 = vmatpush1.bf16.msra.mxu0 0
    %738 = vmatprep.subr.bf16.mxu0 0
    %739 = vmatpush1.bf16.msra.mxu0 0
    %740 = vmatprep.subr.bf16.mxu0 0
    %741 = vmatpush1.bf16.msra.mxu0 0
    %742 = vmatprep.subr.bf16.mxu0 0
    %743 = vmatpush1.bf16.msra.mxu0 0
    %744 = vmatprep.subr.bf16.mxu0 0
    %745 = vmatpush1.bf16.msra.mxu0 0
    %746 = vmatprep.subr.bf16.mxu0 0
    %747 = vmatpush1.bf16.msra.mxu0 0
    %748 = vmatprep.subr.bf16.mxu0 0
    %749 = vmatpush1.bf16.msra.mxu0 0
    %750 = vmatprep.subr.bf16.mxu0 0
    %751 = vmatpush1.bf16.msra.mxu0 0
    %752 = vmatprep.subr.bf16.mxu0 0
    %753 = vmatpush1.bf16.msra.mxu0 0
    %754 = vmatprep.subr.bf16.mxu0 0
    %755 = vmatpush1.bf16.msra.mxu0 0
    %756 = vmatprep.subr.bf16.mxu0 0
    %757 = vmatpush1.bf16.msra.mxu0 0
    %758 = vmatprep.subr.bf16.mxu0 0
    %759 = vmatpush1.bf16.msra.mxu0 0
    %760 = vmatprep.subr.bf16.mxu0 0
    %761 = vmatpush1.bf16.msra.mxu0 0
    %762 = vmatprep.mubr.bf16.mxu0 0
    %763 = vmatmul.mubr.bf16.gmra.mrb[0].mxu0 %v725
    %v764 = vpop.f32.mrb[0].mxu0
    %v765 = vadd.f32 0.0, %v764
    %v766 = vpop.f32.mrb[0].mxu0
    %v767 = vpop.f32.mrb[0].mxu0
    %v768 = vpop.f32.mrb[0].mxu0
    %769 = vdwg.mxu0
    %v770 = vadd.f32 %v612, %v765
    %v772 = vlaneseq
    %v773 = vshrl.u32 %v772, 7
    %v774 = vsub.s32 0, %v773
    %v775 = vrot.slane %v139, %v774
    %v777 = vadd.f32 %v770, %v775
    %778 = vst.msk [vmem:[#allocation8] sm:$0xff] %vm89, %v777
    %v779 = vrot.slane %v134, 4
    %780 = vrot.lane.b32.xlu0 %v779, 96
    %v781 = vpop.permute.xlu0 %780
    %v783 = vsel %vm143, %v779, 0
    %v786 = vsel %vm143, %v781, 0
    %788 = vmatprep.subr.bf16.mxu0 0
    %789 = vmatpush1.bf16.xpose.msra.mxu0 %v786
    %790 = vmatprep.subr.bf16.mxu0 0
    %791 = vmatpush1.bf16.xpose.msra.mxu0 0
    %792 = vmatprep.subr.bf16.mxu0 0
    %793 = vmatpush1.bf16.xpose.msra.mxu0 0
    %794 = vmatprep.subr.bf16.mxu0 0
    %795 = vmatpush1.bf16.xpose.msra.mxu0 0
    %796 = vmatprep.subr.bf16.mxu0 0
    %797 = vmatpush1.bf16.xpose.msra.mxu0 0
    %798 = vmatprep.subr.bf16.mxu0 0
    %799 = vmatpush1.bf16.xpose.msra.mxu0 0
    %800 = vmatprep.subr.bf16.mxu0 0
    %801 = vmatpush1.bf16.xpose.msra.mxu0 0
    %802 = vmatprep.subr.bf16.mxu0 0
    %803 = vmatpush1.bf16.xpose.msra.mxu0 0
    %804 = vmatprep.subr.bf16.mxu0 0
    %805 = vmatpush1.bf16.xpose.msra.mxu0 0
    %806 = vmatprep.subr.bf16.mxu0 0
    %807 = vmatpush1.bf16.xpose.msra.mxu0 0
    %808 = vmatprep.subr.bf16.mxu0 0
    %809 = vmatpush1.bf16.xpose.msra.mxu0 0
    %810 = vmatprep.subr.bf16.mxu0 0
    %811 = vmatpush1.bf16.xpose.msra.mxu0 0
    %812 = vmatprep.subr.bf16.mxu0 0
    %813 = vmatpush1.bf16.xpose.msra.mxu0 0
    %814 = vmatprep.subr.bf16.mxu0 0
    %815 = vmatpush1.bf16.xpose.msra.mxu0 0
    %816 = vmatprep.subr.bf16.mxu0 0
    %817 = vmatpush1.bf16.xpose.msra.mxu0 0
    %818 = vmatprep.subr.bf16.mxu0 0
    %819 = vmatpush1.bf16.xpose.msra.mxu0 0
    %820 = vmatprep.mubr.bf16.mxu0 0
    %821 = vmatmul.mubr.bf16.gmra.mrb[0].mxu0 %v783
    %v822 = vpop.f32.mrb[0].mxu0
    %v823 = vadd.f32 0.0, %v822
    %v824 = vpop.f32.mrb[0].mxu0
    %v825 = vpop.f32.mrb[0].mxu0
    %v826 = vpop.f32.mrb[0].mxu0
    %827 = vdwg.mxu0
    %v828 = vsel %vm143, %v823, -inf
    %829 = vmax.xlane.f32.xlu0 %v828
    %v830 = vpop.xlane.xlu0 %829
    %v831 = vsub.f32 %v823, %v830
    %v832 = vmul.f32 %v831, 1.442695
    %v833 = vpow.pop %v832
    %v834 = vsel %vm143, %v833, 0.0
    %835 = vadd.xlane.f32.xlu0 %v834
    %v836 = vpop.xlane.xlu0 %835
    %v837 = vrcp.pop %v836
    %v838 = vmul.f32 %v833, %v837
    %v839 = vpack.c.bf16 %v838, %v838
    %840 = vrot.lane.b32.xlu0 %v779, 64
    %v841 = vpop.permute.xlu0 %840
    %v843 = vsel %vm143, %v839, 0
    %v846 = vsel %vm207, %v841, 0
    %848 = vmatprep.subr.bf16.mxu0 0
    %849 = vmatpush1.bf16.msra.mxu0 %v846
    %850 = vmatprep.subr.bf16.mxu0 0
    %851 = vmatpush1.bf16.msra.mxu0 0
    %852 = vmatprep.subr.bf16.mxu0 0
    %853 = vmatpush1.bf16.msra.mxu0 0
    %854 = vmatprep.subr.bf16.mxu0 0
    %855 = vmatpush1.bf16.msra.mxu0 0
    %856 = vmatprep.subr.bf16.mxu0 0
    %857 = vmatpush1.bf16.msra.mxu0 0
    %858 = vmatprep.subr.bf16.mxu0 0
    %859 = vmatpush1.bf16.msra.mxu0 0
    %860 = vmatprep.subr.bf16.mxu0 0
    %861 = vmatpush1.bf16.msra.mxu0 0
    %862 = vmatprep.subr.bf16.mxu0 0
    %863 = vmatpush1.bf16.msra.mxu0 0
    %864 = vmatprep.subr.bf16.mxu0 0
    %865 = vmatpush1.bf16.msra.mxu0 0
    %866 = vmatprep.subr.bf16.mxu0 0
    %867 = vmatpush1.bf16.msra.mxu0 0
    %868 = vmatprep.subr.bf16.mxu0 0
    %869 = vmatpush1.bf16.msra.mxu0 0
    %870 = vmatprep.subr.bf16.mxu0 0
    %871 = vmatpush1.bf16.msra.mxu0 0
    %872 = vmatprep.subr.bf16.mxu0 0
    %873 = vmatpush1.bf16.msra.mxu0 0
    %874 = vmatprep.subr.bf16.mxu0 0
    %875 = vmatpush1.bf16.msra.mxu0 0
    %876 = vmatprep.subr.bf16.mxu0 0
    %877 = vmatpush1.bf16.msra.mxu0 0
    %878 = vmatprep.subr.bf16.mxu0 0
    %879 = vmatpush1.bf16.msra.mxu0 0
    %880 = vmatprep.mubr.bf16.mxu0 0
    %881 = vmatmul.mubr.bf16.gmra.mrb[0].mxu0 %v843
    %v882 = vpop.f32.mrb[0].mxu0
    %v883 = vadd.f32 0.0, %v882
    %v884 = vpop.f32.mrb[0].mxu0
    %v885 = vpop.f32.mrb[0].mxu0
    %v886 = vpop.f32.mrb[0].mxu0
    %887 = vdwg.mxu0
    %v888 = vpack.c.bf16 %v883, %v883
    %889 = vrot.lane.b32.xlu0 %v779, 120
    %v890 = vpop.permute.xlu0 %889
    %891 = vrot.lane.b32.xlu0 %v779, 88
    %v892 = vpop.permute.xlu0 %891
    %v894 = vsel %vm143, %v890, 0
    %v897 = vsel %vm143, %v892, 0
    %899 = vmatprep.subr.bf16.mxu0 0
    %900 = vmatpush1.bf16.xpose.msra.mxu0 %v897
    %901 = vmatprep.subr.bf16.mxu0 0
    %902 = vmatpush1.bf16.xpose.msra.mxu0 0
    %903 = vmatprep.subr.bf16.mxu0 0
    %904 = vmatpush1.bf16.xpose.msra.mxu0 0
    %905 = vmatprep.subr.bf16.mxu0 0
    %906 = vmatpush1.bf16.xpose.msra.mxu0 0
    %907 = vmatprep.subr.bf16.mxu0 0
    %908 = vmatpush1.bf16.xpose.msra.mxu0 0
    %909 = vmatprep.subr.bf16.mxu0 0
    %910 = vmatpush1.bf16.xpose.msra.mxu0 0
    %911 = vmatprep.subr.bf16.mxu0 0
    %912 = vmatpush1.bf16.xpose.msra.mxu0 0
    %913 = vmatprep.subr.bf16.mxu0 0
    %914 = vmatpush1.bf16.xpose.msra.mxu0 0
    %915 = vmatprep.subr.bf16.mxu0 0
    %916 = vmatpush1.bf16.xpose.msra.mxu0 0
    %917 = vmatprep.subr.bf16.mxu0 0
    %918 = vmatpush1.bf16.xpose.msra.mxu0 0
    %919 = vmatprep.subr.bf16.mxu0 0
    %920 = vmatpush1.bf16.xpose.msra.mxu0 0
    %921 = vmatprep.subr.bf16.mxu0 0
    %922 = vmatpush1.bf16.xpose.msra.mxu0 0
    %923 = vmatprep.subr.bf16.mxu0 0
    %924 = vmatpush1.bf16.xpose.msra.mxu0 0
    %925 = vmatprep.subr.bf16.mxu0 0
    %926 = vmatpush1.bf16.xpose.msra.mxu0 0
    %927 = vmatprep.subr.bf16.mxu0 0
    %928 = vmatpush1.bf16.xpose.msra.mxu0 0
    %929 = vmatprep.subr.bf16.mxu0 0
    %930 = vmatpush1.bf16.xpose.msra.mxu0 0
    %931 = vmatprep.mubr.bf16.mxu0 0
    %932 = vmatmul.mubr.bf16.gmra.mrb[0].mxu0 %v894
    %v933 = vpop.f32.mrb[0].mxu0
    %v934 = vadd.f32 0.0, %v933
    %v935 = vpop.f32.mrb[0].mxu0
    %v936 = vpop.f32.mrb[0].mxu0
    %v937 = vpop.f32.mrb[0].mxu0
    %938 = vdwg.mxu0
    %v939 = vsel %vm143, %v934, -inf
    %940 = vmax.xlane.f32.xlu0 %v939
    %v941 = vpop.xlane.xlu0 %940
    %v942 = vsub.f32 %v934, %v941
    %v943 = vmul.f32 %v942, 1.442695
    %v944 = vpow.pop %v943
    %v945 = vsel %vm143, %v944, 0.0
    %946 = vadd.xlane.f32.xlu0 %v945
    %v947 = vpop.xlane.xlu0 %946
    %v948 = vrcp.pop %v947
    %v949 = vmul.f32 %v944, %v948
    %v950 = vpack.c.bf16 %v949, %v949
    %951 = vrot.lane.b32.xlu0 %v779, 56
    %v952 = vpop.permute.xlu0 %951
    %v954 = vsel %vm143, %v950, 0
    %v957 = vsel %vm207, %v952, 0
    %959 = vmatprep.subr.bf16.mxu0 0
    %960 = vmatpush1.bf16.msra.mxu0 %v957
    %961 = vmatprep.subr.bf16.mxu0 0
    %962 = vmatpush1.bf16.msra.mxu0 0
    %963 = vmatprep.subr.bf16.mxu0 0
    %964 = vmatpush1.bf16.msra.mxu0 0
    %965 = vmatprep.subr.bf16.mxu0 0
    %966 = vmatpush1.bf16.msra.mxu0 0
    %967 = vmatprep.subr.bf16.mxu0 0
    %968 = vmatpush1.bf16.msra.mxu0 0
    %969 = vmatprep.subr.bf16.mxu0 0
    %970 = vmatpush1.bf16.msra.mxu0 0
    %971 = vmatprep.subr.bf16.mxu0 0
    %972 = vmatpush1.bf16.msra.mxu0 0
    %973 = vmatprep.subr.bf16.mxu0 0
    %974 = vmatpush1.bf16.msra.mxu0 0
    %975 = vmatprep.subr.bf16.mxu0 0
    %976 = vmatpush1.bf16.msra.mxu0 0
    %977 = vmatprep.subr.bf16.mxu0 0
    %978 = vmatpush1.bf16.msra.mxu0 0
    %979 = vmatprep.subr.bf16.mxu0 0
    %980 = vmatpush1.bf16.msra.mxu0 0
    %981 = vmatprep.subr.bf16.mxu0 0
    %982 = vmatpush1.bf16.msra.mxu0 0
    %983 = vmatprep.subr.bf16.mxu0 0
    %984 = vmatpush1.bf16.msra.mxu0 0
    %985 = vmatprep.subr.bf16.mxu0 0
    %986 = vmatpush1.bf16.msra.mxu0 0
    %987 = vmatprep.subr.bf16.mxu0 0
    %988 = vmatpush1.bf16.msra.mxu0 0
    %989 = vmatprep.subr.bf16.mxu0 0
    %990 = vmatpush1.bf16.msra.mxu0 0
    %991 = vmatprep.mubr.bf16.mxu0 0
    %992 = vmatmul.mubr.bf16.gmra.mrb[0].mxu0 %v954
    %v993 = vpop.f32.mrb[0].mxu0
    %v994 = vadd.f32 0.0, %v993
    %v995 = vpop.f32.mrb[0].mxu0
    %v996 = vpop.f32.mrb[0].mxu0
    %v997 = vpop.f32.mrb[0].mxu0
    %998 = vdwg.mxu0
    %v999 = vpack.c.bf16 %v994, %v994
    %v1001 = vsel %vm143, %v999, 0
    %1003 = vmatprep.subr.bf16.mxu0 0
    %1004 = vmatpush1.bf16.msra.mxu0 %v367
    %1005 = vmatprep.subr.bf16.mxu0 0
    %1006 = vmatpush1.bf16.msra.mxu0 0
    %1007 = vmatprep.subr.bf16.mxu0 0
    %1008 = vmatpush1.bf16.msra.mxu0 0
    %1009 = vmatprep.subr.bf16.mxu0 0
    %1010 = vmatpush1.bf16.msra.mxu0 0
    %1011 = vmatprep.subr.bf16.mxu0 0
    %1012 = vmatpush1.bf16.msra.mxu0 0
    %1013 = vmatprep.subr.bf16.mxu0 0
    %1014 = vmatpush1.bf16.msra.mxu0 0
    %1015 = vmatprep.subr.bf16.mxu0 0
    %1016 = vmatpush1.bf16.msra.mxu0 0
    %1017 = vmatprep.subr.bf16.mxu0 0
    %1018 = vmatpush1.bf16.msra.mxu0 0
    %1019 = vmatprep.subr.bf16.mxu0 0
    %1020 = vmatpush1.bf16.msra.mxu0 0
    %1021 = vmatprep.subr.bf16.mxu0 0
    %1022 = vmatpush1.bf16.msra.mxu0 0
    %1023 = vmatprep.subr.bf16.mxu0 0
    %1024 = vmatpush1.bf16.msra.mxu0 0
    %1025 = vmatprep.subr.bf16.mxu0 0
    %1026 = vmatpush1.bf16.msra.mxu0 0
    %1027 = vmatprep.subr.bf16.mxu0 0
    %1028 = vmatpush1.bf16.msra.mxu0 0
    %1029 = vmatprep.subr.bf16.mxu0 0
    %1030 = vmatpush1.bf16.msra.mxu0 0
    %1031 = vmatprep.subr.bf16.mxu0 0
    %1032 = vmatpush1.bf16.msra.mxu0 0
    %1033 = vmatprep.subr.bf16.mxu0 0
    %1034 = vmatpush1.bf16.msra.mxu0 0
    %1035 = vmatprep.mubr.bf16.mxu0 0
    %1036 = vmatmul.mubr.bf16.gmra.mrb[0].mxu0 %v1001
    %v1037 = vpop.f32.mrb[0].mxu0
    %v1038 = vadd.f32 0.0, %v1037
    %v1039 = vpop.f32.mrb[0].mxu0
    %v1040 = vpop.f32.mrb[0].mxu0
    %v1041 = vpop.f32.mrb[0].mxu0
    %1042 = vdwg.mxu0
    %v1044 = vsel %vm143, %v888, 0
    %1046 = vmatprep.subr.bf16.mxu0 0
    %1047 = vmatpush1.bf16.msra.mxu0 %v413
    %1048 = vmatprep.subr.bf16.mxu0 0
    %1049 = vmatpush1.bf16.msra.mxu0 0
    %1050 = vmatprep.subr.bf16.mxu0 0
    %1051 = vmatpush1.bf16.msra.mxu0 0
    %1052 = vmatprep.subr.bf16.mxu0 0
    %1053 = vmatpush1.bf16.msra.mxu0 0
    %1054 = vmatprep.subr.bf16.mxu0 0
    %1055 = vmatpush1.bf16.msra.mxu0 0
    %1056 = vmatprep.subr.bf16.mxu0 0
    %1057 = vmatpush1.bf16.msra.mxu0 0
    %1058 = vmatprep.subr.bf16.mxu0 0
    %1059 = vmatpush1.bf16.msra.mxu0 0
    %1060 = vmatprep.subr.bf16.mxu0 0
    %1061 = vmatpush1.bf16.msra.mxu0 0
    %1062 = vmatprep.subr.bf16.mxu0 0
    %1063 = vmatpush1.bf16.msra.mxu0 0
    %1064 = vmatprep.subr.bf16.mxu0 0
    %1065 = vmatpush1.bf16.msra.mxu0 0
    %1066 = vmatprep.subr.bf16.mxu0 0
    %1067 = vmatpush1.bf16.msra.mxu0 0
    %1068 = vmatprep.subr.bf16.mxu0 0
    %1069 = vmatpush1.bf16.msra.mxu0 0
    %1070 = vmatprep.subr.bf16.mxu0 0
    %1071 = vmatpush1.bf16.msra.mxu0 0
    %1072 = vmatprep.subr.bf16.mxu0 0
    %1073 = vmatpush1.bf16.msra.mxu0 0
    %1074 = vmatprep.subr.bf16.mxu0 0
    %1075 = vmatpush1.bf16.msra.mxu0 0
    %1076 = vmatprep.subr.bf16.mxu0 0
    %1077 = vmatpush1.bf16.msra.mxu0 0
    %1078 = vmatprep.mubr.bf16.mxu0 0
    %1079 = vmatmul.mubr.bf16.gmra.mrb[0].mxu0 %v1044
    %v1080 = vpop.f32.mrb[0].mxu0
    %v1081 = vadd.f32 %v1038, %v1080
    %v1082 = vpop.f32.mrb[0].mxu0
    %v1083 = vpop.f32.mrb[0].mxu0
    %v1084 = vpop.f32.mrb[0].mxu0
    %1085 = vdwg.mxu0
    %1086 = vrot.lane.b32.xlu0 %v779, 112
    %v1087 = vpop.permute.xlu0 %1086
    %1088 = vrot.lane.b32.xlu0 %v779, 80
    %v1089 = vpop.permute.xlu0 %1088
    %v1091 = vsel %vm143, %v1087, 0
    %v1094 = vsel %vm143, %v1089, 0
    %1096 = vmatprep.subr.bf16.mxu0 0
    %1097 = vmatpush1.bf16.xpose.msra.mxu0 %v1094
    %1098 = vmatprep.subr.bf16.mxu0 0
    %1099 = vmatpush1.bf16.xpose.msra.mxu0 0
    %1100 = vmatprep.subr.bf16.mxu0 0
    %1101 = vmatpush1.bf16.xpose.msra.mxu0 0
    %1102 = vmatprep.subr.bf16.mxu0 0
    %1103 = vmatpush1.bf16.xpose.msra.mxu0 0
    %1104 = vmatprep.subr.bf16.mxu0 0
    %1105 = vmatpush1.bf16.xpose.msra.mxu0 0
    %1106 = vmatprep.subr.bf16.mxu0 0
    %1107 = vmatpush1.bf16.xpose.msra.mxu0 0
    %1108 = vmatprep.subr.bf16.mxu0 0
    %1109 = vmatpush1.bf16.xpose.msra.mxu0 0
    %1110 = vmatprep.subr.bf16.mxu0 0
    %1111 = vmatpush1.bf16.xpose.msra.mxu0 0
    %1112 = vmatprep.subr.bf16.mxu0 0
    %1113 = vmatpush1.bf16.xpose.msra.mxu0 0
    %1114 = vmatprep.subr.bf16.mxu0 0
    %1115 = vmatpush1.bf16.xpose.msra.mxu0 0
    %1116 = vmatprep.subr.bf16.mxu0 0
    %1117 = vmatpush1.bf16.xpose.msra.mxu0 0
    %1118 = vmatprep.subr.bf16.mxu0 0
    %1119 = vmatpush1.bf16.xpose.msra.mxu0 0
    %1120 = vmatprep.subr.bf16.mxu0 0
    %1121 = vmatpush1.bf16.xpose.msra.mxu0 0
    %1122 = vmatprep.subr.bf16.mxu0 0
    %1123 = vmatpush1.bf16.xpose.msra.mxu0 0
    %1124 = vmatprep.subr.bf16.mxu0 0
    %1125 = vmatpush1.bf16.xpose.msra.mxu0 0
    %1126 = vmatprep.subr.bf16.mxu0 0
    %1127 = vmatpush1.bf16.xpose.msra.mxu0 0
    %1128 = vmatprep.mubr.bf16.mxu0 0
    %1129 = vmatmul.mubr.bf16.gmra.mrb[0].mxu0 %v1091
    %v1130 = vpop.f32.mrb[0].mxu0
    %v1131 = vadd.f32 0.0, %v1130
    %v1132 = vpop.f32.mrb[0].mxu0
    %v1133 = vpop.f32.mrb[0].mxu0
    %v1134 = vpop.f32.mrb[0].mxu0
    %1135 = vdwg.mxu0
    %v1136 = vsel %vm143, %v1131, -inf
    %1137 = vmax.xlane.f32.xlu0 %v1136
    %v1138 = vpop.xlane.xlu0 %1137
    %v1139 = vsub.f32 %v1131, %v1138
    %v1140 = vmul.f32 %v1139, 1.442695
    %v1141 = vpow.pop %v1140
    %v1142 = vsel %vm143, %v1141, 0.0
    %1143 = vadd.xlane.f32.xlu0 %v1142
    %v1144 = vpop.xlane.xlu0 %1143
    %v1145 = vrcp.pop %v1144
    %v1146 = vmul.f32 %v1141, %v1145
    %v1147 = vpack.c.bf16 %v1146, %v1146
    %1148 = vrot.lane.b32.xlu0 %v779, 48
    %v1149 = vpop.permute.xlu0 %1148
    %v1151 = vsel %vm143, %v1147, 0
    %v1154 = vsel %vm207, %v1149, 0
    %1156 = vmatprep.subr.bf16.mxu0 0
    %1157 = vmatpush1.bf16.msra.mxu0 %v1154
    %1158 = vmatprep.subr.bf16.mxu0 0
    %1159 = vmatpush1.bf16.msra.mxu0 0
    %1160 = vmatprep.subr.bf16.mxu0 0
    %1161 = vmatpush1.bf16.msra.mxu0 0
    %1162 = vmatprep.subr.bf16.mxu0 0
    %1163 = vmatpush1.bf16.msra.mxu0 0
    %1164 = vmatprep.subr.bf16.mxu0 0
    %1165 = vmatpush1.bf16.msra.mxu0 0
    %1166 = vmatprep.subr.bf16.mxu0 0
    %1167 = vmatpush1.bf16.msra.mxu0 0
    %1168 = vmatprep.subr.bf16.mxu0 0
    %1169 = vmatpush1.bf16.msra.mxu0 0
    %1170 = vmatprep.subr.bf16.mxu0 0
    %1171 = vmatpush1.bf16.msra.mxu0 0
    %1172 = vmatprep.subr.bf16.mxu0 0
    %1173 = vmatpush1.bf16.msra.mxu0 0
    %1174 = vmatprep.subr.bf16.mxu0 0
    %1175 = vmatpush1.bf16.msra.mxu0 0
    %1176 = vmatprep.subr.bf16.mxu0 0
    %1177 = vmatpush1.bf16.msra.mxu0 0
    %1178 = vmatprep.subr.bf16.mxu0 0
    %1179 = vmatpush1.bf16.msra.mxu0 0
    %1180 = vmatprep.subr.bf16.mxu0 0
    %1181 = vmatpush1.bf16.msra.mxu0 0
    %1182 = vmatprep.subr.bf16.mxu0 0
    %1183 = vmatpush1.bf16.msra.mxu0 0
    %1184 = vmatprep.subr.bf16.mxu0 0
    %1185 = vmatpush1.bf16.msra.mxu0 0
    %1186 = vmatprep.subr.bf16.mxu0 0
    %1187 = vmatpush1.bf16.msra.mxu0 0
    %1188 = vmatprep.mubr.bf16.mxu0 0
    %1189 = vmatmul.mubr.bf16.gmra.mrb[0].mxu0 %v1151
    %v1190 = vpop.f32.mrb[0].mxu0
    %v1191 = vadd.f32 0.0, %v1190
    %v1192 = vpop.f32.mrb[0].mxu0
    %v1193 = vpop.f32.mrb[0].mxu0
    %v1194 = vpop.f32.mrb[0].mxu0
    %1195 = vdwg.mxu0
    %v1196 = vpack.c.bf16 %v1191, %v1191
    %v1198 = vsel %vm143, %v1196, 0
    %1200 = vmatprep.subr.bf16.mxu0 0
    %1201 = vmatpush1.bf16.msra.mxu0 %v570
    %1202 = vmatprep.subr.bf16.mxu0 0
    %1203 = vmatpush1.bf16.msra.mxu0 0
    %1204 = vmatprep.subr.bf16.mxu0 0
    %1205 = vmatpush1.bf16.msra.mxu0 0
    %1206 = vmatprep.subr.bf16.mxu0 0
    %1207 = vmatpush1.bf16.msra.mxu0 0
    %1208 = vmatprep.subr.bf16.mxu0 0
    %1209 = vmatpush1.bf16.msra.mxu0 0
    %1210 = vmatprep.subr.bf16.mxu0 0
    %1211 = vmatpush1.bf16.msra.mxu0 0
    %1212 = vmatprep.subr.bf16.mxu0 0
    %1213 = vmatpush1.bf16.msra.mxu0 0
    %1214 = vmatprep.subr.bf16.mxu0 0
    %1215 = vmatpush1.bf16.msra.mxu0 0
    %1216 = vmatprep.subr.bf16.mxu0 0
    %1217 = vmatpush1.bf16.msra.mxu0 0
    %1218 = vmatprep.subr.bf16.mxu0 0
    %1219 = vmatpush1.bf16.msra.mxu0 0
    %1220 = vmatprep.subr.bf16.mxu0 0
    %1221 = vmatpush1.bf16.msra.mxu0 0
    %1222 = vmatprep.subr.bf16.mxu0 0
    %1223 = vmatpush1.bf16.msra.mxu0 0
    %1224 = vmatprep.subr.bf16.mxu0 0
    %1225 = vmatpush1.bf16.msra.mxu0 0
    %1226 = vmatprep.subr.bf16.mxu0 0
    %1227 = vmatpush1.bf16.msra.mxu0 0
    %1228 = vmatprep.subr.bf16.mxu0 0
    %1229 = vmatpush1.bf16.msra.mxu0 0
    %1230 = vmatprep.subr.bf16.mxu0 0
    %1231 = vmatpush1.bf16.msra.mxu0 0
    %1232 = vmatprep.mubr.bf16.mxu0 0
    %1233 = vmatmul.mubr.bf16.gmra.mrb[0].mxu0 %v1198
    %v1234 = vpop.f32.mrb[0].mxu0
    %v1235 = vadd.f32 0.0, %v1234
    %v1236 = vpop.f32.mrb[0].mxu0
    %v1237 = vpop.f32.mrb[0].mxu0
    %v1238 = vpop.f32.mrb[0].mxu0
    %1239 = vdwg.mxu0
    %v1240 = vadd.f32 %v1081, %v1235
    %1241 = vrot.lane.b32.xlu0 %v779, 104
    %v1242 = vpop.permute.xlu0 %1241
    %1243 = vrot.lane.b32.xlu0 %v779, 72
    %v1244 = vpop.permute.xlu0 %1243
    %v1246 = vsel %vm143, %v1242, 0
    %v1249 = vsel %vm143, %v1244, 0
    %1251 = vmatprep.subr.bf16.mxu0 0
    %1252 = vmatpush1.bf16.xpose.msra.mxu0 %v1249
    %1253 = vmatprep.subr.bf16.mxu0 0
    %1254 = vmatpush1.bf16.xpose.msra.mxu0 0
    %1255 = vmatprep.subr.bf16.mxu0 0
    %1256 = vmatpush1.bf16.xpose.msra.mxu0 0
    %1257 = vmatprep.subr.bf16.mxu0 0
    %1258 = vmatpush1.bf16.xpose.msra.mxu0 0
    %1259 = vmatprep.subr.bf16.mxu0 0
    %1260 = vmatpush1.bf16.xpose.msra.mxu0 0
    %1261 = vmatprep.subr.bf16.mxu0 0
    %1262 = vmatpush1.bf16.xpose.msra.mxu0 0
    %1263 = vmatprep.subr.bf16.mxu0 0
    %1264 = vmatpush1.bf16.xpose.msra.mxu0 0
    %1265 = vmatprep.subr.bf16.mxu0 0
    %1266 = vmatpush1.bf16.xpose.msra.mxu0 0
    %1267 = vmatprep.subr.bf16.mxu0 0
    %1268 = vmatpush1.bf16.xpose.msra.mxu0 0
    %1269 = vmatprep.subr.bf16.mxu0 0
    %1270 = vmatpush1.bf16.xpose.msra.mxu0 0
    %1271 = vmatprep.subr.bf16.mxu0 0
    %1272 = vmatpush1.bf16.xpose.msra.mxu0 0
    %1273 = vmatprep.subr.bf16.mxu0 0
    %1274 = vmatpush1.bf16.xpose.msra.mxu0 0
    %1275 = vmatprep.subr.bf16.mxu0 0
    %1276 = vmatpush1.bf16.xpose.msra.mxu0 0
    %1277 = vmatprep.subr.bf16.mxu0 0
    %1278 = vmatpush1.bf16.xpose.msra.mxu0 0
    %1279 = vmatprep.subr.bf16.mxu0 0
    %1280 = vmatpush1.bf16.xpose.msra.mxu0 0
    %1281 = vmatprep.subr.bf16.mxu0 0
    %1282 = vmatpush1.bf16.xpose.msra.mxu0 0
    %1283 = vmatprep.mubr.bf16.mxu0 0
    %1284 = vmatmul.mubr.bf16.gmra.mrb[0].mxu0 %v1246
    %v1285 = vpop.f32.mrb[0].mxu0
    %v1286 = vadd.f32 0.0, %v1285
    %v1287 = vpop.f32.mrb[0].mxu0
    %v1288 = vpop.f32.mrb[0].mxu0
    %v1289 = vpop.f32.mrb[0].mxu0
    %1290 = vdwg.mxu0
    %v1291 = vsel %vm143, %v1286, -inf
    %1292 = vmax.xlane.f32.xlu0 %v1291
    %v1293 = vpop.xlane.xlu0 %1292
    %v1294 = vsub.f32 %v1286, %v1293
    %v1295 = vmul.f32 %v1294, 1.442695
    %v1296 = vpow.pop %v1295
    %v1297 = vsel %vm143, %v1296, 0.0
    %1298 = vadd.xlane.f32.xlu0 %v1297
    %v1299 = vpop.xlane.xlu0 %1298
    %v1300 = vrcp.pop %v1299
    %v1301 = vmul.f32 %v1296, %v1300
    %v1302 = vpack.c.bf16 %v1301, %v1301
    %1303 = vrot.lane.b32.xlu0 %v779, 40
    %v1304 = vpop.permute.xlu0 %1303
    %v1306 = vsel %vm143, %v1302, 0
    %v1309 = vsel %vm207, %v1304, 0
    %1311 = vmatprep.subr.bf16.mxu0 0
    %1312 = vmatpush1.bf16.msra.mxu0 %v1309
    %1313 = vmatprep.subr.bf16.mxu0 0
    %1314 = vmatpush1.bf16.msra.mxu0 0
    %1315 = vmatprep.subr.bf16.mxu0 0
    %1316 = vmatpush1.bf16.msra.mxu0 0
    %1317 = vmatprep.subr.bf16.mxu0 0
    %1318 = vmatpush1.bf16.msra.mxu0 0
    %1319 = vmatprep.subr.bf16.mxu0 0
    %1320 = vmatpush1.bf16.msra.mxu0 0
    %1321 = vmatprep.subr.bf16.mxu0 0
    %1322 = vmatpush1.bf16.msra.mxu0 0
    %1323 = vmatprep.subr.bf16.mxu0 0
    %1324 = vmatpush1.bf16.msra.mxu0 0
    %1325 = vmatprep.subr.bf16.mxu0 0
    %1326 = vmatpush1.bf16.msra.mxu0 0
    %1327 = vmatprep.subr.bf16.mxu0 0
    %1328 = vmatpush1.bf16.msra.mxu0 0
    %1329 = vmatprep.subr.bf16.mxu0 0
    %1330 = vmatpush1.bf16.msra.mxu0 0
    %1331 = vmatprep.subr.bf16.mxu0 0
    %1332 = vmatpush1.bf16.msra.mxu0 0
    %1333 = vmatprep.subr.bf16.mxu0 0
    %1334 = vmatpush1.bf16.msra.mxu0 0
    %1335 = vmatprep.subr.bf16.mxu0 0
    %1336 = vmatpush1.bf16.msra.mxu0 0
    %1337 = vmatprep.subr.bf16.mxu0 0
    %1338 = vmatpush1.bf16.msra.mxu0 0
    %1339 = vmatprep.subr.bf16.mxu0 0
    %1340 = vmatpush1.bf16.msra.mxu0 0
    %1341 = vmatprep.subr.bf16.mxu0 0
    %1342 = vmatpush1.bf16.msra.mxu0 0
    %1343 = vmatprep.mubr.bf16.mxu0 0
    %1344 = vmatmul.mubr.bf16.gmra.mrb[0].mxu0 %v1306
    %v1345 = vpop.f32.mrb[0].mxu0
    %v1346 = vadd.f32 0.0, %v1345
    %v1347 = vpop.f32.mrb[0].mxu0
    %v1348 = vpop.f32.mrb[0].mxu0
    %v1349 = vpop.f32.mrb[0].mxu0
    %1350 = vdwg.mxu0
    %v1351 = vpack.c.bf16 %v1346, %v1346
    %v1353 = vsel %vm143, %v1351, 0
    %1355 = vmatprep.subr.bf16.mxu0 0
    %1356 = vmatpush1.bf16.msra.mxu0 %v728
    %1357 = vmatprep.subr.bf16.mxu0 0
    %1358 = vmatpush1.bf16.msra.mxu0 0
    %1359 = vmatprep.subr.bf16.mxu0 0
    %1360 = vmatpush1.bf16.msra.mxu0 0
    %1361 = vmatprep.subr.bf16.mxu0 0
    %1362 = vmatpush1.bf16.msra.mxu0 0
    %1363 = vmatprep.subr.bf16.mxu0 0
    %1364 = vmatpush1.bf16.msra.mxu0 0
    %1365 = vmatprep.subr.bf16.mxu0 0
    %1366 = vmatpush1.bf16.msra.mxu0 0
    %1367 = vmatprep.subr.bf16.mxu0 0
    %1368 = vmatpush1.bf16.msra.mxu0 0
    %1369 = vmatprep.subr.bf16.mxu0 0
    %1370 = vmatpush1.bf16.msra.mxu0 0
    %1371 = vmatprep.subr.bf16.mxu0 0
    %1372 = vmatpush1.bf16.msra.mxu0 0
    %1373 = vmatprep.subr.bf16.mxu0 0
    %1374 = vmatpush1.bf16.msra.mxu0 0
    %1375 = vmatprep.subr.bf16.mxu0 0
    %1376 = vmatpush1.bf16.msra.mxu0 0
    %1377 = vmatprep.subr.bf16.mxu0 0
    %1378 = vmatpush1.bf16.msra.mxu0 0
    %1379 = vmatprep.subr.bf16.mxu0 0
    %1380 = vmatpush1.bf16.msra.mxu0 0
    %1381 = vmatprep.subr.bf16.mxu0 0
    %1382 = vmatpush1.bf16.msra.mxu0 0
    %1383 = vmatprep.subr.bf16.mxu0 0
    %1384 = vmatpush1.bf16.msra.mxu0 0
    %1385 = vmatprep.subr.bf16.mxu0 0
    %1386 = vmatpush1.bf16.msra.mxu0 0
    %1387 = vmatprep.mubr.bf16.mxu0 0
    %1388 = vmatmul.mubr.bf16.gmra.mrb[0].mxu0 %v1353
    %v1389 = vpop.f32.mrb[0].mxu0
    %v1390 = vadd.f32 0.0, %v1389
    %v1391 = vpop.f32.mrb[0].mxu0
    %v1392 = vpop.f32.mrb[0].mxu0
    %v1393 = vpop.f32.mrb[0].mxu0
    %1394 = vdwg.mxu0
    %v1395 = vadd.f32 %v1240, %v1390
    %v1396 = vadd.f32 %v1395, %v775
    %1397 = vst.msk [vmem:[#allocation8 + $0x8] sm:$0xff] %vm89, %v1396
    // Predicated region
    $region34: #{tpu_custom_call.1} parent=1 // pred_check
      _
    $region35: #{tpu_custom_call.1} parent=1 // pred_check_branch
      %1399 = sbr.rel (0) target = $region37
    $region36: #{tpu_custom_call.1} parent=1 // pred_region
      %s1401 = ssub.s32 256, 256
      %1402 = vsyncadd [#allocation4], %s1401
      %s1403 = sshll.u32 [#allocation8], 4
      %s1404 = int_to_ptr.vmem [resolvable:$true] %s1403
      %1409 = dma.vmem_to_hbm [thread:$0]  %s1404, 256, %s5, [#allocation4], 128, 128, 8
    $region37: #{tpu_custom_call.1} parent=1 // pred_fallthru
      _
    // Predicated region
    $region38: #{tpu_custom_call.1} parent=1 // pred_check
      _
    $region39: #{tpu_custom_call.1} parent=1 // pred_check_branch
      %1411 = sbr.rel (0) target = $region41
    $region40: #{tpu_custom_call.1} parent=1 // pred_region
      %1412 = dma.done [#allocation4], 256
    $region41: #{tpu_custom_call.1} parent=1 // pred_fallthru
      _
    %1413 = vsyncpa [#allocation3], 1
    %1414 = vsyncpa [#allocation6], 1
    %1415 = vsyncpa [#allocation4], 1

</llo_original>
